<compile_context>
chip_gen: v7x
topology: tpu7x:2x2x1
jax: 0.10.0
libtpu: 0.0.40
codegen_flags: <defaults>
</compile_context>

<pallas_src>
import numpy as np
import jax
import jax.numpy as jnp
from jax import lax
from jax.experimental import pallas as pl
from jax.experimental.pallas import tpu as pltpu


# ----------------------------------------------------------------------------
# Fused per-layer kernel: gate projection (MXU) + bidirectional scan.
# ----------------------------------------------------------------------------

def _fused_bidir_sru_layer_kernel(xf_ref, xb_ref, wf_ref, wb_ref,
                                  bf_ref, bb_ref,
                                  hf_ref, hb_ref, c_ref,
                                  u_sc, c_sc):
    """One L-chunk of a bidirectional SRU layer.  Grid: 1-D over L-chunks
    ("arbitrary": the recurrence is sequential, state carried in c_sc).

    xf_ref : (Lc*B, n_in)  bf16  input rows, forward time order (chunk l)
    xb_ref : (Lc*B, n_in)  bf16  input rows of x[::-1] (chunk l) -> the backward
                                 recurrence runs FORWARD over these rows
    wf_ref : (n_in, 4H)    bf16  fwd weights, columns [x_tilde | f | r | hw]
    wb_ref : (n_in, 4H)    bf16  bwd weights, same column layout
    bf/bb  : (1, 4H)       f32   biases (forget/reset folded in, zero elsewhere)
    hf_ref : (Lc, B, H)    f32   fwd hidden states, forward time order
    hb_ref : (Lc, B, H)    f32   bwd hidden states, reversed time order
    c_ref  : (2B, H)       f32   [c_fwd_final ; c_bwd_final]
    u_sc   : VMEM (2, Lc*B, 4H) f32  per-chunk gate pre-activations (never HBM)
    c_sc   : VMEM (2B, H)       f32  cell state carried across chunks
    """
    Lc, B, H = hf_ref.shape

    @pl.when(pl.program_id(0) == 0)
    def _():
        c_sc[...] = jnp.zeros_like(c_sc)

    # Fused gate projections for the whole chunk: bf16 operands on the MXU,
    # f32 accumulation, f32 bias added once.  Results stay in VMEM scratch.
    u_sc[0] = jnp.dot(xf_ref[...], wf_ref[...],
                      preferred_element_type=jnp.float32) + bf_ref[...]
    u_sc[1] = jnp.dot(xb_ref[...], wb_ref[...],
                      preferred_element_type=jnp.float32) + bb_ref[...]

    def step(j, c):
        # Pack both directions along the sublane axis: one (2B, 4H) slab per
        # scan step (rows 0:B = fwd at local time j, rows B:2B = bwd step j).
        row = pl.multiple_of(j * B, B)
        u_t = jnp.concatenate(
            [u_sc[0, pl.ds(row, B), :], u_sc[1, pl.ds(row, B), :]], axis=0)
        x_t = u_t[:, 0:H]
        fr = jax.nn.sigmoid(u_t[:, H:3 * H])        # one EUP pass over [f | r]
        f = fr[:, 0:H]
        r = fr[:, H:2 * H]
        hw = u_t[:, 3 * H:4 * H]
        c_new = x_t + f * (c - x_t)                 # == f*c + (1-f)*x_tilde
        h = hw + r * (jnp.tanh(c_new) - hw)         # == r*tanh(c) + (1-r)*hw
        hf_ref[j] = h[0:B, :]                       # fwd h at local time j
        hb_ref[j] = h[B:2 * B, :]                   # bwd h (reversed-time slab)
        return c_new

    # fori_loop keeps vreg pressure ~constant at production L; a small unroll
    # still lets the LLO scheduler interleave the two independent recurrences.
    c = lax.fori_loop(0, Lc, step, c_sc[...], unroll=min(8, Lc))
    c_sc[...] = c
    c_ref[...] = c        # last chunk's write is the final state


def sru_bidir_layer(x, lw, l_chunk=128):
    """One bidirectional SRU layer.  x: (L, B, n_in) f32.
    Returns h (L, B, 2H) f32 and final cell states c (B, 2H) f32."""
    L, B, n_in = x.shape
    H = lw["bf"].shape[1] // 4

    # Largest chunk length <= l_chunk that divides L.  For production, size Lc
    # so (2 double-buffered bf16 x chunks) + (f32 u scratch: Lc*B*8H*4B) +
    # (2 h out chunks) stays under ~28-30 MiB on v7x (64 MiB VMEM) and can grow
    # toward the ceiling on v5e/v6e (128 MiB VMEM).
    Lc = max(1, min(l_chunk, L))
    while L % Lc:
        Lc -= 1
    nc = L // Lc

    xf = x.reshape(L * B, n_in).astype(jnp.bfloat16)
    # Wrapper-side time reversal: the backward recurrence then runs forward
    # over its chunks, so a single "arbitrary" chunk axis serves both dirs.
    xb = x[::-1].reshape(L * B, n_in).astype(jnp.bfloat16)

    hf, hb_rev, c2 = pl.pallas_call(
        _fused_bidir_sru_layer_kernel,
        grid=(nc,),
        in_specs=[
            pl.BlockSpec((Lc * B, n_in), lambda l: (l, 0)),   # x fwd chunk
            pl.BlockSpec((Lc * B, n_in), lambda l: (l, 0)),   # x bwd (reversed) chunk
            pl.BlockSpec((n_in, 4 * H), lambda l: (0, 0)),    # W fwd (resident)
            pl.BlockSpec((n_in, 4 * H), lambda l: (0, 0)),    # W bwd (resident)
            pl.BlockSpec((1, 4 * H), lambda l: (0, 0)),       # bias fwd
            pl.BlockSpec((1, 4 * H), lambda l: (0, 0)),       # bias bwd
        ],
        out_specs=(
            pl.BlockSpec((Lc, B, H), lambda l: (l, 0, 0)),    # h fwd
            pl.BlockSpec((Lc, B, H), lambda l: (l, 0, 0)),    # h bwd (reversed time)
            pl.BlockSpec((2 * B, H), lambda l: (0, 0)),       # final cell states
        ),
        out_shape=(
            jax.ShapeDtypeStruct((L, B, H), jnp.float32),
            jax.ShapeDtypeStruct((L, B, H), jnp.float32),
            jax.ShapeDtypeStruct((2 * B, H), jnp.float32),
        ),
        scratch_shapes=[
            pltpu.VMEM((2, Lc * B, 4 * H), jnp.float32),      # per-chunk gate slab
            pltpu.VMEM((2 * B, H), jnp.float32),              # carried cell state
        ],
        compiler_params=pltpu.CompilerParams(
            dimension_semantics=("arbitrary",),               # sequential recurrence
            vmem_limit_bytes=32 * 1024 * 1024),
    )(xf, xb, lw["wf"], lw["wb"], lw["bf"], lw["bb"])

    # Wrapper-side layout plumbing only (no compute): un-reverse the backward
    # direction and interleave [h_fwd | h_bwd] / [c_fwd | c_bwd].
    h = jnp.concatenate([hf, hb_rev[::-1]], axis=-1)          # (L, B, 2H)
    c = jnp.concatenate([c2[0:B], c2[B:2 * B]], axis=-1)      # (B, 2H)
    return h, c


# ----------------------------------------------------------------------------
# Parameter fusion (done once, outside the forward hot path)
# ----------------------------------------------------------------------------

def fuse_sru_layers(raw_layers, H):
    """Per direction: W (n_in, 4H) bf16 with columns [x_tilde | f | r | hw] and an
    f32 (1, 4H) bias with the forget/reset biases folded in.  For SRU v1 k == 3
    layers (n_in == 2H) an identity column block is folded into W so the highway
    slot carries this direction's RAW input half with no extra pass."""
    fused = []
    for p in raw_layers:
        n_in = p["w_fwd"].shape[0]
        k = p["w_fwd"].shape[1] // H
        if k == 3:
            eye = jnp.eye(n_in, dtype=jnp.float32)
            wf = jnp.concatenate([p["w_fwd"], eye[:, 0:H]], axis=1)
            wb = jnp.concatenate([p["w_bwd"], eye[:, H:2 * H]], axis=1)
        else:
            wf, wb = p["w_fwd"], p["w_bwd"]
        z = jnp.zeros((H,), jnp.float32)
        bf = jnp.concatenate([z, p["bf_fwd"], p["br_fwd"], z]).reshape(1, 4 * H)
        bb = jnp.concatenate([z, p["bf_bwd"], p["br_bwd"], z]).reshape(1, 4 * H)
        fused.append(dict(wf=wf.astype(jnp.bfloat16),
                          wb=wb.astype(jnp.bfloat16),
                          bf=bf, bb=bb))
    return fused


# ----------------------------------------------------------------------------
# Encoder forward (glue in plain JAX, hot path fused in Pallas)
# ----------------------------------------------------------------------------

def encoder_forward(params, token_ids, *, l_chunk=4):
    """token_ids: (L, B) int32 -> (encoder_output (L,B,2H), hidden (num_layers,B,H))."""
    # Embedding lookup (padding_idx row is zero).  Dropouts are identity in eval.
    # TODO(synk): fuse this gather into the first layer's gate matmul via
    # PrefetchScalarGridSpec + pl.Element row gather to avoid the (L,B,E) HBM pass.
    x = jnp.take(params["embedding"], token_ids, axis=0)          # (L, B, E) f32

    c_states = []
    for lw in params["sru_layers"]:
        x, c = sru_bidir_layer(x, lw, l_chunk=l_chunk)            # (L,B,2H), (B,2H)
        c_states.append(c)

    encoder_output = x                                            # (L, B, 2H)
    hidden = jnp.stack(c_states, axis=0)                          # (num_layers, B, 2H)

    # dense_hidden: M = num_layers*B is tiny, pallas_call fixed overhead would
    # exceed the compute -> keep this one matmul in plain XLA.
    hidden_out = hidden @ params["w_dense"] + params["b_dense"]   # (num_layers, B, H)
    return encoder_output, hidden_out


# ----------------------------------------------------------------------------
# Pure-JAX reference from the RAW (unfused) per-direction SRU weights.
# Matmul operands are bf16 like the kernel's MXU path; recurrence is f32.
# This independently checks the weight/bias fusion convention used above.
# ----------------------------------------------------------------------------

def encoder_forward_reference(params, token_ids):
    x = jnp.take(params["embedding"], token_ids, axis=0)
    c_states = []
    for p in params["raw_layers"]:
        L, B, n_in = x.shape
        H = p["bf_fwd"].shape[0]
        k = p["w_fwd"].shape[1] // H
        x16 = x.astype(jnp.bfloat16)

        def run_dir(w, b_f, b_r, hw_lo, reverse):
            u = jnp.dot(x16.reshape(L * B, n_in), w.astype(jnp.bfloat16),
                        preferred_element_type=jnp.float32).reshape(L, B, k, H)
            x_t = u[:, :, 0]
            f = jax.nn.sigmoid(u[:, :, 1] + b_f)
            r = jax.nn.sigmoid(u[:, :, 2] + b_r)
            if k == 4:
                hw = u[:, :, 3]
            else:  # SRU v1 raw-input highway: this direction's input half
                hw = x16[:, :, hw_lo:hw_lo + H].astype(jnp.float32)
            xs = (x_t, f, r, hw)
            if reverse:
                xs = tuple(a[::-1] for a in xs)

            def step(c, inp):
                xt, ft, rt, hwt = inp
                c_new = ft * c + (1.0 - ft) * xt
                h = rt * jnp.tanh(c_new) + (1.0 - rt) * hwt
                return c_new, h

            c_last, hs = lax.scan(step, jnp.zeros((B, H), jnp.float32), xs)
            if reverse:
                hs = hs[::-1]
            return hs, c_last

        h_f, c_f = run_dir(p["w_fwd"], p["bf_fwd"], p["br_fwd"], 0, False)
        h_b, c_b = run_dir(p["w_bwd"], p["bf_bwd"], p["br_bwd"], H, True)
        x = jnp.concatenate([h_f, h_b], axis=-1)
        c_states.append(jnp.concatenate([c_f, c_b], axis=-1))
    hidden = jnp.stack(c_states, axis=0)
    return x, hidden @ params["w_dense"] + params["b_dense"]


# ----------------------------------------------------------------------------
# Deterministic parameter construction
# ----------------------------------------------------------------------------

def make_params(key, vocab_size, pad_idx, E, H, num_layers):
    keys = jax.random.split(key, 3 + num_layers)
    emb = 0.1 * jax.random.normal(keys[0], (vocab_size, E), jnp.float32)
    emb = emb.at[pad_idx].set(0.0)                        # padding_idx row zeroed

    raw_layers = []
    for l in range(num_layers):
        n_in = E if l == 0 else 2 * H
        out_size = 2 * H
        # SRU v1: 3 weight chunks per direction when n_in == out_size (raw-input
        # highway), 4 chunks otherwise (projected highway).
        k = 4 if n_in != out_size else 3
        lk = jax.random.split(keys[3 + l], 6)
        scale = 1.0 / jnp.sqrt(jnp.float32(n_in))
        raw_layers.append(dict(
            w_fwd=scale * jax.random.normal(lk[0], (n_in, k * H), jnp.float32),
            w_bwd=scale * jax.random.normal(lk[1], (n_in, k * H), jnp.float32),
            bf_fwd=0.01 * jax.random.normal(lk[2], (H,), jnp.float32),
            br_fwd=0.01 * jax.random.normal(lk[3], (H,), jnp.float32),
            bf_bwd=0.01 * jax.random.normal(lk[4], (H,), jnp.float32),
            br_bwd=0.01 * jax.random.normal(lk[5], (H,), jnp.float32),
        ))

    w_dense = (1.0 / jnp.sqrt(jnp.float32(2 * H))) * jax.random.normal(
        keys[1], (2 * H, H), jnp.float32)
    b_dense = 0.01 * jax.random.normal(keys[2], (H,), jnp.float32)

    return dict(embedding=emb,
                raw_layers=raw_layers,
                sru_layers=fuse_sru_layers(raw_layers, H),
                w_dense=w_dense, b_dense=b_dense)


# ----------------------------------------------------------------------------
# main
# ----------------------------------------------------------------------------

if __name__ == "__main__":
    VOCAB = 50
    PAD_IDX = 0
    E = 32          # args.embedding_size
    H = 32          # args.hidden_size
    NUM_LAYERS = 2  # args.layer_size
    L = 8           # sequence length
    B = 2           # batch size

    key = jax.random.PRNGKey(0)
    pkey, dkey = jax.random.split(key)
    params = make_params(pkey, VOCAB, PAD_IDX, E, H, NUM_LAYERS)

    token_ids = jax.random.randint(dkey, (L, B), 0, VOCAB, dtype=jnp.int32)
    token_ids = token_ids.at[L - 1, :].set(PAD_IDX)   # exercise padding_idx

    fwd = jax.jit(encoder_forward)                    # l_chunk=4 -> 2 chunks of L
    encoder_output, hidden_state = fwd(params, token_ids)
    jax.block_until_ready((encoder_output, hidden_state))

    assert encoder_output.shape == (L, B, 2 * H)
    assert hidden_state.shape == (NUM_LAYERS, B, H)
    assert bool(jnp.all(jnp.isfinite(encoder_output)))
    assert bool(jnp.all(jnp.isfinite(hidden_state)))

    # Reference uses the RAW (unfused) per-direction weights -> checks the fusion
    # convention.  Both paths use bf16 matmul operands with f32 accumulation, so
    # the tolerance only has to absorb Mosaic-vs-XLA transcendental differences.
    ref_out, ref_hidden = encoder_forward_reference(params, token_ids)
    np.testing.assert_allclose(np.asarray(encoder_output), np.asarray(ref_out),
                               rtol=5e-3, atol=5e-3)
    np.testing.assert_allclose(np.asarray(hidden_state), np.asarray(ref_hidden),
                               rtol=5e-3, atol=5e-3)

    print("KERNEL_OK")
</pallas_src>

<mosaic_0001>
module attributes {stable_mosaic.version = 11 : i64} {
  func.func @_fused_bidir_sru_layer_kernel(%arg0: i32, %arg1: memref<8x32xbf16, #tpu.memory_space<vmem>>, %arg2: memref<8x32xbf16, #tpu.memory_space<vmem>>, %arg3: memref<32x128xbf16, #tpu.memory_space<vmem>>, %arg4: memref<32x128xbf16, #tpu.memory_space<vmem>>, %arg5: memref<1x128xf32, #tpu.memory_space<vmem>>, %arg6: memref<1x128xf32, #tpu.memory_space<vmem>>, %arg7: memref<4x2x32xf32, #tpu.memory_space<vmem>>, %arg8: memref<4x2x32xf32, #tpu.memory_space<vmem>>, %arg9: memref<4x32xf32, #tpu.memory_space<vmem>>, %arg10: memref<2x8x128xf32, #tpu.memory_space<vmem>>, %arg11: memref<4x32xf32, #tpu.memory_space<vmem>>) attributes {dimension_semantics = [#tpu.dimension_semantics<arbitrary>], iteration_bounds = array<i64: 2>, scalar_prefetch = 0 : i64, scratch_operands = 2 : i64, tpu.core_type = #tpu.core_type<tc>, window_params = [{transform_indices = @transform_0, window_bounds = array<i64: 8, 32>}, {transform_indices = @transform_1, window_bounds = array<i64: 8, 32>}, {pipeline_mode = #tpu.pipeline_mode<synchronous>, transform_indices = @transform_2, window_bounds = array<i64: 32, 128>}, {pipeline_mode = #tpu.pipeline_mode<synchronous>, transform_indices = @transform_3, window_bounds = array<i64: 32, 128>}, {pipeline_mode = #tpu.pipeline_mode<synchronous>, transform_indices = @transform_4, window_bounds = array<i64: 1, 128>}, {pipeline_mode = #tpu.pipeline_mode<synchronous>, transform_indices = @transform_5, window_bounds = array<i64: 1, 128>}, {transform_indices = @transform_6, window_bounds = array<i64: 4, 2, 32>}, {transform_indices = @transform_7, window_bounds = array<i64: 4, 2, 32>}, {pipeline_mode = #tpu.pipeline_mode<synchronous>, transform_indices = @transform_8, window_bounds = array<i64: 4, 32>}]} {
    %c0_i32 = arith.constant 0 : i32
    %0 = arith.cmpi eq, %arg0, %c0_i32 : i32
    %1 = arith.extui %0 : i1 to i32
    %c0_i32_0 = arith.constant 0 : i32
    %2 = arith.cmpi ne, %1, %c0_i32_0 : i32
    scf.if %2 {
      %cst_65 = arith.constant 0.000000e+00 : f32
      %168 = vector.broadcast %cst_65 : f32 to vector<4x32xf32>
      %c0_66 = arith.constant 0 : index
      %c0_67 = arith.constant 0 : index
      %169 = vector.load %arg11[%c0_66, %c0_67] : memref<4x32xf32, #tpu.memory_space<vmem>>, vector<4x32xf32>
      tpu.vector_store %arg11[%c0_66, %c0_67], %168 {strides = array<i32>} : memref<4x32xf32, #tpu.memory_space<vmem>>, vector<4x32xf32>,
    } else {
    }
    %c0 = arith.constant 0 : index
    %c0_1 = arith.constant 0 : index
    %3 = vector.load %arg1[%c0, %c0_1] : memref<8x32xbf16, #tpu.memory_space<vmem>>, vector<8x32xbf16>
    %c0_2 = arith.constant 0 : index
    %c0_3 = arith.constant 0 : index
    %4 = vector.load %arg3[%c0_2, %c0_3] : memref<32x128xbf16, #tpu.memory_space<vmem>>, vector<32x128xbf16>
    %cst = arith.constant dense<0.000000e+00> : vector<8x128xf32>
    %5 = tpu.matmul %3, %4, %cst {dimension_numbers = #tpu.dot_dimension_numbers<[1], [0], [0], [1], [0, 0, 1, 1], [], []>} : vector<8x32xbf16>, vector<32x128xbf16>, vector<8x128xf32> -> vector<8x128xf32>
    %c0_4 = arith.constant 0 : index
    %c0_5 = arith.constant 0 : index
    %6 = vector.load %arg5[%c0_4, %c0_5] : memref<1x128xf32, #tpu.memory_space<vmem>>, vector<1x128xf32>
    %7 = vector.broadcast %6 : vector<1x128xf32> to vector<8x128xf32>
    %8 = arith.addf %5, %7 : vector<8x128xf32>
    %c0_6 = arith.constant 0 : index
    %c0_7 = arith.constant 0 : index
    %c0_8 = arith.constant 0 : index
    %9 = vector.load %arg10[%c0_6, %c0_7, %c0_8] : memref<2x8x128xf32, #tpu.memory_space<vmem>>, vector<1x8x128xf32>
    %10 = vector.shape_cast %9 : vector<1x8x128xf32> to vector<8x128xf32>
    %11 = vector.shape_cast %8 : vector<8x128xf32> to vector<1x8x128xf32>
    tpu.vector_store %arg10[%c0_6, %c0_7, %c0_8], %11 {strides = array<i32>} : memref<2x8x128xf32, #tpu.memory_space<vmem>>, vector<1x8x128xf32>,
    %c0_9 = arith.constant 0 : index
    %c0_10 = arith.constant 0 : index
    %12 = vector.load %arg2[%c0_9, %c0_10] : memref<8x32xbf16, #tpu.memory_space<vmem>>, vector<8x32xbf16>
    %c0_11 = arith.constant 0 : index
    %c0_12 = arith.constant 0 : index
    %13 = vector.load %arg4[%c0_11, %c0_12] : memref<32x128xbf16, #tpu.memory_space<vmem>>, vector<32x128xbf16>
    %cst_13 = arith.constant dense<0.000000e+00> : vector<8x128xf32>
    %14 = tpu.matmul %12, %13, %cst_13 {dimension_numbers = #tpu.dot_dimension_numbers<[1], [0], [0], [1], [0, 0, 1, 1], [], []>} : vector<8x32xbf16>, vector<32x128xbf16>, vector<8x128xf32> -> vector<8x128xf32>
    %c0_14 = arith.constant 0 : index
    %c0_15 = arith.constant 0 : index
    %15 = vector.load %arg6[%c0_14, %c0_15] : memref<1x128xf32, #tpu.memory_space<vmem>>, vector<1x128xf32>
    %16 = vector.broadcast %15 : vector<1x128xf32> to vector<8x128xf32>
    %17 = arith.addf %14, %16 : vector<8x128xf32>
    %c1 = arith.constant 1 : index
    %c0_16 = arith.constant 0 : index
    %c0_17 = arith.constant 0 : index
    %18 = vector.load %arg10[%c1, %c0_16, %c0_17] : memref<2x8x128xf32, #tpu.memory_space<vmem>>, vector<1x8x128xf32>
    %19 = vector.shape_cast %18 : vector<1x8x128xf32> to vector<8x128xf32>
    %20 = vector.shape_cast %17 : vector<8x128xf32> to vector<1x8x128xf32>
    tpu.vector_store %arg10[%c1, %c0_16, %c0_17], %20 {strides = array<i32>} : memref<2x8x128xf32, #tpu.memory_space<vmem>>, vector<1x8x128xf32>,
    %c0_18 = arith.constant 0 : index
    %c0_19 = arith.constant 0 : index
    %21 = vector.load %arg11[%c0_18, %c0_19] : memref<4x32xf32, #tpu.memory_space<vmem>>, vector<4x32xf32>
    %c0_i32_20 = arith.constant 0 : i32
    %c2_i32 = arith.constant 2 : i32
    %22 = arith.muli %c0_i32_20, %c2_i32 : i32
    %23 = tpu.assume_multiple %22, 2 : i32
    %c0_21 = arith.constant 0 : index
    %24 = arith.index_cast %23 : i32 to index
    %c0_22 = arith.constant 0 : index
    %25 = vector.load %arg10[%c0_21, %24, %c0_22] : memref<2x8x128xf32, #tpu.memory_space<vmem>>, vector<1x2x128xf32>
    %26 = vector.shape_cast %25 : vector<1x2x128xf32> to vector<2x128xf32>
    %c1_23 = arith.constant 1 : index
    %27 = arith.index_cast %23 : i32 to index
    %c0_24 = arith.constant 0 : index
    %28 = vector.load %arg10[%c1_23, %27, %c0_24] : memref<2x8x128xf32, #tpu.memory_space<vmem>>, vector<1x2x128xf32>
    %29 = vector.shape_cast %28 : vector<1x2x128xf32> to vector<2x128xf32>
    %30 = tpu.concatenate %26, %29 in 0 : vector<2x128xf32>, vector<2x128xf32> -> vector<4x128xf32>
    %31 = vector.extract_strided_slice %30 {offsets = [0, 0], sizes = [4, 32], strides = [1, 1]} : vector<4x128xf32> to vector<4x32xf32>
    %32 = vector.extract_strided_slice %30 {offsets = [0, 32], sizes = [4, 64], strides = [1, 1]} : vector<4x128xf32> to vector<4x64xf32>
    %33 = arith.negf %32 : vector<4x64xf32>
    %34 = math.exp %33 : vector<4x64xf32>
    %cst_25 = arith.constant 1.000000e+00 : f32
    %35 = vector.broadcast %cst_25 : f32 to vector<4x64xf32>
    %36 = arith.addf %35, %34 : vector<4x64xf32>
    %37 = arith.divf %35, %36 : vector<4x64xf32>
    %38 = vector.extract_strided_slice %37 {offsets = [0, 0], sizes = [4, 32], strides = [1, 1]} : vector<4x64xf32> to vector<4x32xf32>
    %39 = vector.extract_strided_slice %37 {offsets = [0, 32], sizes = [4, 32], strides = [1, 1]} : vector<4x64xf32> to vector<4x32xf32>
    %40 = vector.extract_strided_slice %30 {offsets = [0, 96], sizes = [4, 32], strides = [1, 1]} : vector<4x128xf32> to vector<4x32xf32>
    %41 = arith.subf %21, %31 : vector<4x32xf32>
    %42 = arith.mulf %38, %41 : vector<4x32xf32>
    %43 = arith.addf %31, %42 : vector<4x32xf32>
    %44 = math.tanh %43 : vector<4x32xf32>
    %45 = arith.subf %44, %40 : vector<4x32xf32>
    %46 = arith.mulf %39, %45 : vector<4x32xf32>
    %47 = arith.addf %40, %46 : vector<4x32xf32>
    %48 = vector.extract_strided_slice %47 {offsets = [0, 0], sizes = [2, 32], strides = [1, 1]} : vector<4x32xf32> to vector<2x32xf32>
    %49 = arith.index_cast %c0_i32_20 : i32 to index
    %c0_26 = arith.constant 0 : index
    %c0_27 = arith.constant 0 : index
    %50 = vector.load %arg7[%49, %c0_26, %c0_27] : memref<4x2x32xf32, #tpu.memory_space<vmem>>, vector<1x2x32xf32>
    %51 = vector.shape_cast %50 : vector<1x2x32xf32> to vector<2x32xf32>
    %52 = vector.shape_cast %48 : vector<2x32xf32> to vector<1x2x32xf32>
    tpu.vector_store %arg7[%49, %c0_26, %c0_27], %52 {strides = array<i32>} : memref<4x2x32xf32, #tpu.memory_space<vmem>>, vector<1x2x32xf32>,
    %53 = vector.extract_strided_slice %47 {offsets = [2, 0], sizes = [2, 32], strides = [1, 1]} : vector<4x32xf32> to vector<2x32xf32>
    %54 = arith.index_cast %c0_i32_20 : i32 to index
    %c0_28 = arith.constant 0 : index
    %c0_29 = arith.constant 0 : index
    %55 = vector.load %arg8[%54, %c0_28, %c0_29] : memref<4x2x32xf32, #tpu.memory_space<vmem>>, vector<1x2x32xf32>
    %56 = vector.shape_cast %55 : vector<1x2x32xf32> to vector<2x32xf32>
    %57 = vector.shape_cast %53 : vector<2x32xf32> to vector<1x2x32xf32>
    tpu.vector_store %arg8[%54, %c0_28, %c0_29], %57 {strides = array<i32>} : memref<4x2x32xf32, #tpu.memory_space<vmem>>, vector<1x2x32xf32>,
    %c1_i32 = arith.constant 1 : i32
    %c2_i32_30 = arith.constant 2 : i32
    %58 = arith.muli %c1_i32, %c2_i32_30 : i32
    %59 = tpu.assume_multiple %58, 2 : i32
    %c0_31 = arith.constant 0 : index
    %60 = arith.index_cast %59 : i32 to index
    %c0_32 = arith.constant 0 : index
    %61 = vector.load %arg10[%c0_31, %60, %c0_32] : memref<2x8x128xf32, #tpu.memory_space<vmem>>, vector<1x2x128xf32>
    %62 = vector.shape_cast %61 : vector<1x2x128xf32> to vector<2x128xf32>
    %c1_33 = arith.constant 1 : index
    %63 = arith.index_cast %59 : i32 to index
    %c0_34 = arith.constant 0 : index
    %64 = vector.load %arg10[%c1_33, %63, %c0_34] : memref<2x8x128xf32, #tpu.memory_space<vmem>>, vector<1x2x128xf32>
    %65 = vector.shape_cast %64 : vector<1x2x128xf32> to vector<2x128xf32>
    %66 = tpu.concatenate %62, %65 in 0 : vector<2x128xf32>, vector<2x128xf32> -> vector<4x128xf32>
    %67 = vector.extract_strided_slice %66 {offsets = [0, 0], sizes = [4, 32], strides = [1, 1]} : vector<4x128xf32> to vector<4x32xf32>
    %68 = vector.extract_strided_slice %66 {offsets = [0, 32], sizes = [4, 64], strides = [1, 1]} : vector<4x128xf32> to vector<4x64xf32>
    %69 = arith.negf %68 : vector<4x64xf32>
    %70 = math.exp %69 : vector<4x64xf32>
    %cst_35 = arith.constant 1.000000e+00 : f32
    %71 = vector.broadcast %cst_35 : f32 to vector<4x64xf32>
    %72 = arith.addf %71, %70 : vector<4x64xf32>
    %73 = arith.divf %71, %72 : vector<4x64xf32>
    %74 = vector.extract_strided_slice %73 {offsets = [0, 0], sizes = [4, 32], strides = [1, 1]} : vector<4x64xf32> to vector<4x32xf32>
    %75 = vector.extract_strided_slice %73 {offsets = [0, 32], sizes = [4, 32], strides = [1, 1]} : vector<4x64xf32> to vector<4x32xf32>
    %76 = vector.extract_strided_slice %66 {offsets = [0, 96], sizes = [4, 32], strides = [1, 1]} : vector<4x128xf32> to vector<4x32xf32>
    %77 = arith.subf %43, %67 : vector<4x32xf32>
    %78 = arith.mulf %74, %77 : vector<4x32xf32>
    %79 = arith.addf %67, %78 : vector<4x32xf32>
    %80 = math.tanh %79 : vector<4x32xf32>
    %81 = arith.subf %80, %76 : vector<4x32xf32>
    %82 = arith.mulf %75, %81 : vector<4x32xf32>
    %83 = arith.addf %76, %82 : vector<4x32xf32>
    %84 = vector.extract_strided_slice %83 {offsets = [0, 0], sizes = [2, 32], strides = [1, 1]} : vector<4x32xf32> to vector<2x32xf32>
    %85 = arith.index_cast %c1_i32 : i32 to index
    %c0_36 = arith.constant 0 : index
    %c0_37 = arith.constant 0 : index
    %86 = vector.load %arg7[%85, %c0_36, %c0_37] : memref<4x2x32xf32, #tpu.memory_space<vmem>>, vector<1x2x32xf32>
    %87 = vector.shape_cast %86 : vector<1x2x32xf32> to vector<2x32xf32>
    %88 = vector.shape_cast %84 : vector<2x32xf32> to vector<1x2x32xf32>
    tpu.vector_store %arg7[%85, %c0_36, %c0_37], %88 {strides = array<i32>} : memref<4x2x32xf32, #tpu.memory_space<vmem>>, vector<1x2x32xf32>,
    %89 = vector.extract_strided_slice %83 {offsets = [2, 0], sizes = [2, 32], strides = [1, 1]} : vector<4x32xf32> to vector<2x32xf32>
    %90 = arith.index_cast %c1_i32 : i32 to index
    %c0_38 = arith.constant 0 : index
    %c0_39 = arith.constant 0 : index
    %91 = vector.load %arg8[%90, %c0_38, %c0_39] : memref<4x2x32xf32, #tpu.memory_space<vmem>>, vector<1x2x32xf32>
    %92 = vector.shape_cast %91 : vector<1x2x32xf32> to vector<2x32xf32>
    %93 = vector.shape_cast %89 : vector<2x32xf32> to vector<1x2x32xf32>
    tpu.vector_store %arg8[%90, %c0_38, %c0_39], %93 {strides = array<i32>} : memref<4x2x32xf32, #tpu.memory_space<vmem>>, vector<1x2x32xf32>,
    %c2_i32_40 = arith.constant 2 : i32
    %c2_i32_41 = arith.constant 2 : i32
    %94 = arith.muli %c2_i32_40, %c2_i32_41 : i32
    %95 = tpu.assume_multiple %94, 2 : i32
    %c0_42 = arith.constant 0 : index
    %96 = arith.index_cast %95 : i32 to index
    %c0_43 = arith.constant 0 : index
    %97 = vector.load %arg10[%c0_42, %96, %c0_43] : memref<2x8x128xf32, #tpu.memory_space<vmem>>, vector<1x2x128xf32>
    %98 = vector.shape_cast %97 : vector<1x2x128xf32> to vector<2x128xf32>
    %c1_44 = arith.constant 1 : index
    %99 = arith.index_cast %95 : i32 to index
    %c0_45 = arith.constant 0 : index
    %100 = vector.load %arg10[%c1_44, %99, %c0_45] : memref<2x8x128xf32, #tpu.memory_space<vmem>>, vector<1x2x128xf32>
    %101 = vector.shape_cast %100 : vector<1x2x128xf32> to vector<2x128xf32>
    %102 = tpu.concatenate %98, %101 in 0 : vector<2x128xf32>, vector<2x128xf32> -> vector<4x128xf32>
    %103 = vector.extract_strided_slice %102 {offsets = [0, 0], sizes = [4, 32], strides = [1, 1]} : vector<4x128xf32> to vector<4x32xf32>
    %104 = vector.extract_strided_slice %102 {offsets = [0, 32], sizes = [4, 64], strides = [1, 1]} : vector<4x128xf32> to vector<4x64xf32>
    %105 = arith.negf %104 : vector<4x64xf32>
    %106 = math.exp %105 : vector<4x64xf32>
    %cst_46 = arith.constant 1.000000e+00 : f32
    %107 = vector.broadcast %cst_46 : f32 to vector<4x64xf32>
    %108 = arith.addf %107, %106 : vector<4x64xf32>
    %109 = arith.divf %107, %108 : vector<4x64xf32>
    %110 = vector.extract_strided_slice %109 {offsets = [0, 0], sizes = [4, 32], strides = [1, 1]} : vector<4x64xf32> to vector<4x32xf32>
    %111 = vector.extract_strided_slice %109 {offsets = [0, 32], sizes = [4, 32], strides = [1, 1]} : vector<4x64xf32> to vector<4x32xf32>
    %112 = vector.extract_strided_slice %102 {offsets = [0, 96], sizes = [4, 32], strides = [1, 1]} : vector<4x128xf32> to vector<4x32xf32>
    %113 = arith.subf %79, %103 : vector<4x32xf32>
    %114 = arith.mulf %110, %113 : vector<4x32xf32>
    %115 = arith.addf %103, %114 : vector<4x32xf32>
    %116 = math.tanh %115 : vector<4x32xf32>
    %117 = arith.subf %116, %112 : vector<4x32xf32>
    %118 = arith.mulf %111, %117 : vector<4x32xf32>
    %119 = arith.addf %112, %118 : vector<4x32xf32>
    %120 = vector.extract_strided_slice %119 {offsets = [0, 0], sizes = [2, 32], strides = [1, 1]} : vector<4x32xf32> to vector<2x32xf32>
    %121 = arith.index_cast %c2_i32_40 : i32 to index
    %c0_47 = arith.constant 0 : index
    %c0_48 = arith.constant 0 : index
    %122 = vector.load %arg7[%121, %c0_47, %c0_48] : memref<4x2x32xf32, #tpu.memory_space<vmem>>, vector<1x2x32xf32>
    %123 = vector.shape_cast %122 : vector<1x2x32xf32> to vector<2x32xf32>
    %124 = vector.shape_cast %120 : vector<2x32xf32> to vector<1x2x32xf32>
    tpu.vector_store %arg7[%121, %c0_47, %c0_48], %124 {strides = array<i32>} : memref<4x2x32xf32, #tpu.memory_space<vmem>>, vector<1x2x32xf32>,
    %125 = vector.extract_strided_slice %119 {offsets = [2, 0], sizes = [2, 32], strides = [1, 1]} : vector<4x32xf32> to vector<2x32xf32>
    %126 = arith.index_cast %c2_i32_40 : i32 to index
    %c0_49 = arith.constant 0 : index
    %c0_50 = arith.constant 0 : index
    %127 = vector.load %arg8[%126, %c0_49, %c0_50] : memref<4x2x32xf32, #tpu.memory_space<vmem>>, vector<1x2x32xf32>
    %128 = vector.shape_cast %127 : vector<1x2x32xf32> to vector<2x32xf32>
    %129 = vector.shape_cast %125 : vector<2x32xf32> to vector<1x2x32xf32>
    tpu.vector_store %arg8[%126, %c0_49, %c0_50], %129 {strides = array<i32>} : memref<4x2x32xf32, #tpu.memory_space<vmem>>, vector<1x2x32xf32>,
    %c3_i32 = arith.constant 3 : i32
    %c2_i32_51 = arith.constant 2 : i32
    %130 = arith.muli %c3_i32, %c2_i32_51 : i32
    %131 = tpu.assume_multiple %130, 2 : i32
    %c0_52 = arith.constant 0 : index
    %132 = arith.index_cast %131 : i32 to index
    %c0_53 = arith.constant 0 : index
    %133 = vector.load %arg10[%c0_52, %132, %c0_53] : memref<2x8x128xf32, #tpu.memory_space<vmem>>, vector<1x2x128xf32>
    %134 = vector.shape_cast %133 : vector<1x2x128xf32> to vector<2x128xf32>
    %c1_54 = arith.constant 1 : index
    %135 = arith.index_cast %131 : i32 to index
    %c0_55 = arith.constant 0 : index
    %136 = vector.load %arg10[%c1_54, %135, %c0_55] : memref<2x8x128xf32, #tpu.memory_space<vmem>>, vector<1x2x128xf32>
    %137 = vector.shape_cast %136 : vector<1x2x128xf32> to vector<2x128xf32>
    %138 = tpu.concatenate %134, %137 in 0 : vector<2x128xf32>, vector<2x128xf32> -> vector<4x128xf32>
    %139 = vector.extract_strided_slice %138 {offsets = [0, 0], sizes = [4, 32], strides = [1, 1]} : vector<4x128xf32> to vector<4x32xf32>
    %140 = vector.extract_strided_slice %138 {offsets = [0, 32], sizes = [4, 64], strides = [1, 1]} : vector<4x128xf32> to vector<4x64xf32>
    %141 = arith.negf %140 : vector<4x64xf32>
    %142 = math.exp %141 : vector<4x64xf32>
    %cst_56 = arith.constant 1.000000e+00 : f32
    %143 = vector.broadcast %cst_56 : f32 to vector<4x64xf32>
    %144 = arith.addf %143, %142 : vector<4x64xf32>
    %145 = arith.divf %143, %144 : vector<4x64xf32>
    %146 = vector.extract_strided_slice %145 {offsets = [0, 0], sizes = [4, 32], strides = [1, 1]} : vector<4x64xf32> to vector<4x32xf32>
    %147 = vector.extract_strided_slice %145 {offsets = [0, 32], sizes = [4, 32], strides = [1, 1]} : vector<4x64xf32> to vector<4x32xf32>
    %148 = vector.extract_strided_slice %138 {offsets = [0, 96], sizes = [4, 32], strides = [1, 1]} : vector<4x128xf32> to vector<4x32xf32>
    %149 = arith.subf %115, %139 : vector<4x32xf32>
    %150 = arith.mulf %146, %149 : vector<4x32xf32>
    %151 = arith.addf %139, %150 : vector<4x32xf32>
    %152 = math.tanh %151 : vector<4x32xf32>
    %153 = arith.subf %152, %148 : vector<4x32xf32>
    %154 = arith.mulf %147, %153 : vector<4x32xf32>
    %155 = arith.addf %148, %154 : vector<4x32xf32>
    %156 = vector.extract_strided_slice %155 {offsets = [0, 0], sizes = [2, 32], strides = [1, 1]} : vector<4x32xf32> to vector<2x32xf32>
    %157 = arith.index_cast %c3_i32 : i32 to index
    %c0_57 = arith.constant 0 : index
    %c0_58 = arith.constant 0 : index
    %158 = vector.load %arg7[%157, %c0_57, %c0_58] : memref<4x2x32xf32, #tpu.memory_space<vmem>>, vector<1x2x32xf32>
    %159 = vector.shape_cast %158 : vector<1x2x32xf32> to vector<2x32xf32>
    %160 = vector.shape_cast %156 : vector<2x32xf32> to vector<1x2x32xf32>
    tpu.vector_store %arg7[%157, %c0_57, %c0_58], %160 {strides = array<i32>} : memref<4x2x32xf32, #tpu.memory_space<vmem>>, vector<1x2x32xf32>,
    %161 = vector.extract_strided_slice %155 {offsets = [2, 0], sizes = [2, 32], strides = [1, 1]} : vector<4x32xf32> to vector<2x32xf32>
    %162 = arith.index_cast %c3_i32 : i32 to index
    %c0_59 = arith.constant 0 : index
    %c0_60 = arith.constant 0 : index
    %163 = vector.load %arg8[%162, %c0_59, %c0_60] : memref<4x2x32xf32, #tpu.memory_space<vmem>>, vector<1x2x32xf32>
    %164 = vector.shape_cast %163 : vector<1x2x32xf32> to vector<2x32xf32>
    %165 = vector.shape_cast %161 : vector<2x32xf32> to vector<1x2x32xf32>
    tpu.vector_store %arg8[%162, %c0_59, %c0_60], %165 {strides = array<i32>} : memref<4x2x32xf32, #tpu.memory_space<vmem>>, vector<1x2x32xf32>,
    %c4_i32 = arith.constant 4 : i32
    %c0_61 = arith.constant 0 : index
    %c0_62 = arith.constant 0 : index
    %166 = vector.load %arg11[%c0_61, %c0_62] : memref<4x32xf32, #tpu.memory_space<vmem>>, vector<4x32xf32>
    tpu.vector_store %arg11[%c0_61, %c0_62], %151 {strides = array<i32>} : memref<4x32xf32, #tpu.memory_space<vmem>>, vector<4x32xf32>,
    %c0_63 = arith.constant 0 : index
    %c0_64 = arith.constant 0 : index
    %167 = vector.load %arg9[%c0_63, %c0_64] : memref<4x32xf32, #tpu.memory_space<vmem>>, vector<4x32xf32>
    tpu.vector_store %arg9[%c0_63, %c0_64], %151 {strides = array<i32>} : memref<4x32xf32, #tpu.memory_space<vmem>>, vector<4x32xf32>,
    return
  }
  func.func @transform_0(%arg0: i32) -> (i32, i32) {
    %c0_i32 = arith.constant 0 : i32
    %c0_i32_0 = arith.constant 0 : i32
    return %arg0, %c0_i32 : i32, i32
  }
  func.func @transform_1(%arg0: i32) -> (i32, i32) {
    %c0_i32 = arith.constant 0 : i32
    %c0_i32_0 = arith.constant 0 : i32
    return %arg0, %c0_i32 : i32, i32
  }
  func.func @transform_2(%arg0: i32) -> (i32, i32) {
    %c0_i32 = arith.constant 0 : i32
    %c0_i32_0 = arith.constant 0 : i32
    %c0_i32_1 = arith.constant 0 : i32
    return %c0_i32, %c0_i32_0 : i32, i32
  }
  func.func @transform_3(%arg0: i32) -> (i32, i32) {
    %c0_i32 = arith.constant 0 : i32
    %c0_i32_0 = arith.constant 0 : i32
    %c0_i32_1 = arith.constant 0 : i32
    return %c0_i32, %c0_i32_0 : i32, i32
  }
  func.func @transform_4(%arg0: i32) -> (i32, i32) {
    %c0_i32 = arith.constant 0 : i32
    %c0_i32_0 = arith.constant 0 : i32
    %c0_i32_1 = arith.constant 0 : i32
    return %c0_i32, %c0_i32_0 : i32, i32
  }
  func.func @transform_5(%arg0: i32) -> (i32, i32) {
    %c0_i32 = arith.constant 0 : i32
    %c0_i32_0 = arith.constant 0 : i32
    %c0_i32_1 = arith.constant 0 : i32
    return %c0_i32, %c0_i32_0 : i32, i32
  }
  func.func @transform_6(%arg0: i32) -> (i32, i32, i32) {
    %c0_i32 = arith.constant 0 : i32
    %c0_i32_0 = arith.constant 0 : i32
    %c0_i32_1 = arith.constant 0 : i32
    return %arg0, %c0_i32, %c0_i32_0 : i32, i32, i32
  }
  func.func @transform_7(%arg0: i32) -> (i32, i32, i32) {
    %c0_i32 = arith.constant 0 : i32
    %c0_i32_0 = arith.constant 0 : i32
    %c0_i32_1 = arith.constant 0 : i32
    return %arg0, %c0_i32, %c0_i32_0 : i32, i32, i32
  }
  func.func @transform_8(%arg0: i32) -> (i32, i32) {
    %c0_i32 = arith.constant 0 : i32
    %c0_i32_0 = arith.constant 0 : i32
    %c0_i32_1 = arith.constant 0 : i32
    return %c0_i32, %c0_i32_0 : i32, i32
  }
}

module attributes {stable_mosaic.version = 11 : i64} {
  func.func @_fused_bidir_sru_layer_kernel(%arg0: i32, %arg1: memref<8x64xbf16, #tpu.memory_space<vmem>>, %arg2: memref<8x64xbf16, #tpu.memory_space<vmem>>, %arg3: memref<64x128xbf16, #tpu.memory_space<vmem>>, %arg4: memref<64x128xbf16, #tpu.memory_space<vmem>>, %arg5: memref<1x128xf32, #tpu.memory_space<vmem>>, %arg6: memref<1x128xf32, #tpu.memory_space<vmem>>, %arg7: memref<4x2x32xf32, #tpu.memory_space<vmem>>, %arg8: memref<4x2x32xf32, #tpu.memory_space<vmem>>, %arg9: memref<4x32xf32, #tpu.memory_space<vmem>>, %arg10: memref<2x8x128xf32, #tpu.memory_space<vmem>>, %arg11: memref<4x32xf32, #tpu.memory_space<vmem>>) attributes {dimension_semantics = [#tpu.dimension_semantics<arbitrary>], iteration_bounds = array<i64: 2>, scalar_prefetch = 0 : i64, scratch_operands = 2 : i64, tpu.core_type = #tpu.core_type<tc>, window_params = [{transform_indices = @transform_0, window_bounds = array<i64: 8, 64>}, {transform_indices = @transform_1, window_bounds = array<i64: 8, 64>}, {pipeline_mode = #tpu.pipeline_mode<synchronous>, transform_indices = @transform_2, window_bounds = array<i64: 64, 128>}, {pipeline_mode = #tpu.pipeline_mode<synchronous>, transform_indices = @transform_3, window_bounds = array<i64: 64, 128>}, {pipeline_mode = #tpu.pipeline_mode<synchronous>, transform_indices = @transform_4, window_bounds = array<i64: 1, 128>}, {pipeline_mode = #tpu.pipeline_mode<synchronous>, transform_indices = @transform_5, window_bounds = array<i64: 1, 128>}, {transform_indices = @transform_6, window_bounds = array<i64: 4, 2, 32>}, {transform_indices = @transform_7, window_bounds = array<i64: 4, 2, 32>}, {pipeline_mode = #tpu.pipeline_mode<synchronous>, transform_indices = @transform_8, window_bounds = array<i64: 4, 32>}]} {
    %c0_i32 = arith.constant 0 : i32
    %0 = arith.cmpi eq, %arg0, %c0_i32 : i32
    %1 = arith.extui %0 : i1 to i32
    %c0_i32_0 = arith.constant 0 : i32
    %2 = arith.cmpi ne, %1, %c0_i32_0 : i32
    scf.if %2 {
      %cst_65 = arith.constant 0.000000e+00 : f32
      %168 = vector.broadcast %cst_65 : f32 to vector<4x32xf32>
      %c0_66 = arith.constant 0 : index
      %c0_67 = arith.constant 0 : index
      %169 = vector.load %arg11[%c0_66, %c0_67] : memref<4x32xf32, #tpu.memory_space<vmem>>, vector<4x32xf32>
      tpu.vector_store %arg11[%c0_66, %c0_67], %168 {strides = array<i32>} : memref<4x32xf32, #tpu.memory_space<vmem>>, vector<4x32xf32>,
    } else {
    }
    %c0 = arith.constant 0 : index
    %c0_1 = arith.constant 0 : index
    %3 = vector.load %arg1[%c0, %c0_1] : memref<8x64xbf16, #tpu.memory_space<vmem>>, vector<8x64xbf16>
    %c0_2 = arith.constant 0 : index
    %c0_3 = arith.constant 0 : index
    %4 = vector.load %arg3[%c0_2, %c0_3] : memref<64x128xbf16, #tpu.memory_space<vmem>>, vector<64x128xbf16>
    %cst = arith.constant dense<0.000000e+00> : vector<8x128xf32>
    %5 = tpu.matmul %3, %4, %cst {dimension_numbers = #tpu.dot_dimension_numbers<[1], [0], [0], [1], [0, 0, 1, 1], [], []>} : vector<8x64xbf16>, vector<64x128xbf16>, vector<8x128xf32> -> vector<8x128xf32>
    %c0_4 = arith.constant 0 : index
    %c0_5 = arith.constant 0 : index
    %6 = vector.load %arg5[%c0_4, %c0_5] : memref<1x128xf32, #tpu.memory_space<vmem>>, vector<1x128xf32>
    %7 = vector.broadcast %6 : vector<1x128xf32> to vector<8x128xf32>
    %8 = arith.addf %5, %7 : vector<8x128xf32>
    %c0_6 = arith.constant 0 : index
    %c0_7 = arith.constant 0 : index
    %c0_8 = arith.constant 0 : index
    %9 = vector.load %arg10[%c0_6, %c0_7, %c0_8] : memref<2x8x128xf32, #tpu.memory_space<vmem>>, vector<1x8x128xf32>
    %10 = vector.shape_cast %9 : vector<1x8x128xf32> to vector<8x128xf32>
    %11 = vector.shape_cast %8 : vector<8x128xf32> to vector<1x8x128xf32>
    tpu.vector_store %arg10[%c0_6, %c0_7, %c0_8], %11 {strides = array<i32>} : memref<2x8x128xf32, #tpu.memory_space<vmem>>, vector<1x8x128xf32>,
    %c0_9 = arith.constant 0 : index
    %c0_10 = arith.constant 0 : index
    %12 = vector.load %arg2[%c0_9, %c0_10] : memref<8x64xbf16, #tpu.memory_space<vmem>>, vector<8x64xbf16>
    %c0_11 = arith.constant 0 : index
    %c0_12 = arith.constant 0 : index
    %13 = vector.load %arg4[%c0_11, %c0_12] : memref<64x128xbf16, #tpu.memory_space<vmem>>, vector<64x128xbf16>
    %cst_13 = arith.constant dense<0.000000e+00> : vector<8x128xf32>
    %14 = tpu.matmul %12, %13, %cst_13 {dimension_numbers = #tpu.dot_dimension_numbers<[1], [0], [0], [1], [0, 0, 1, 1], [], []>} : vector<8x64xbf16>, vector<64x128xbf16>, vector<8x128xf32> -> vector<8x128xf32>
    %c0_14 = arith.constant 0 : index
    %c0_15 = arith.constant 0 : index
    %15 = vector.load %arg6[%c0_14, %c0_15] : memref<1x128xf32, #tpu.memory_space<vmem>>, vector<1x128xf32>
    %16 = vector.broadcast %15 : vector<1x128xf32> to vector<8x128xf32>
    %17 = arith.addf %14, %16 : vector<8x128xf32>
    %c1 = arith.constant 1 : index
    %c0_16 = arith.constant 0 : index
    %c0_17 = arith.constant 0 : index
    %18 = vector.load %arg10[%c1, %c0_16, %c0_17] : memref<2x8x128xf32, #tpu.memory_space<vmem>>, vector<1x8x128xf32>
    %19 = vector.shape_cast %18 : vector<1x8x128xf32> to vector<8x128xf32>
    %20 = vector.shape_cast %17 : vector<8x128xf32> to vector<1x8x128xf32>
    tpu.vector_store %arg10[%c1, %c0_16, %c0_17], %20 {strides = array<i32>} : memref<2x8x128xf32, #tpu.memory_space<vmem>>, vector<1x8x128xf32>,
    %c0_18 = arith.constant 0 : index
    %c0_19 = arith.constant 0 : index
    %21 = vector.load %arg11[%c0_18, %c0_19] : memref<4x32xf32, #tpu.memory_space<vmem>>, vector<4x32xf32>
    %c0_i32_20 = arith.constant 0 : i32
    %c2_i32 = arith.constant 2 : i32
    %22 = arith.muli %c0_i32_20, %c2_i32 : i32
    %23 = tpu.assume_multiple %22, 2 : i32
    %c0_21 = arith.constant 0 : index
    %24 = arith.index_cast %23 : i32 to index
    %c0_22 = arith.constant 0 : index
    %25 = vector.load %arg10[%c0_21, %24, %c0_22] : memref<2x8x128xf32, #tpu.memory_space<vmem>>, vector<1x2x128xf32>
    %26 = vector.shape_cast %25 : vector<1x2x128xf32> to vector<2x128xf32>
    %c1_23 = arith.constant 1 : index
    %27 = arith.index_cast %23 : i32 to index
    %c0_24 = arith.constant 0 : index
    %28 = vector.load %arg10[%c1_23, %27, %c0_24] : memref<2x8x128xf32, #tpu.memory_space<vmem>>, vector<1x2x128xf32>
    %29 = vector.shape_cast %28 : vector<1x2x128xf32> to vector<2x128xf32>
    %30 = tpu.concatenate %26, %29 in 0 : vector<2x128xf32>, vector<2x128xf32> -> vector<4x128xf32>
    %31 = vector.extract_strided_slice %30 {offsets = [0, 0], sizes = [4, 32], strides = [1, 1]} : vector<4x128xf32> to vector<4x32xf32>
    %32 = vector.extract_strided_slice %30 {offsets = [0, 32], sizes = [4, 64], strides = [1, 1]} : vector<4x128xf32> to vector<4x64xf32>
    %33 = arith.negf %32 : vector<4x64xf32>
    %34 = math.exp %33 : vector<4x64xf32>
    %cst_25 = arith.constant 1.000000e+00 : f32
    %35 = vector.broadcast %cst_25 : f32 to vector<4x64xf32>
    %36 = arith.addf %35, %34 : vector<4x64xf32>
    %37 = arith.divf %35, %36 : vector<4x64xf32>
    %38 = vector.extract_strided_slice %37 {offsets = [0, 0], sizes = [4, 32], strides = [1, 1]} : vector<4x64xf32> to vector<4x32xf32>
    %39 = vector.extract_strided_slice %37 {offsets = [0, 32], sizes = [4, 32], strides = [1, 1]} : vector<4x64xf32> to vector<4x32xf32>
    %40 = vector.extract_strided_slice %30 {offsets = [0, 96], sizes = [4, 32], strides = [1, 1]} : vector<4x128xf32> to vector<4x32xf32>
    %41 = arith.subf %21, %31 : vector<4x32xf32>
    %42 = arith.mulf %38, %41 : vector<4x32xf32>
    %43 = arith.addf %31, %42 : vector<4x32xf32>
    %44 = math.tanh %43 : vector<4x32xf32>
    %45 = arith.subf %44, %40 : vector<4x32xf32>
    %46 = arith.mulf %39, %45 : vector<4x32xf32>
    %47 = arith.addf %40, %46 : vector<4x32xf32>
    %48 = vector.extract_strided_slice %47 {offsets = [0, 0], sizes = [2, 32], strides = [1, 1]} : vector<4x32xf32> to vector<2x32xf32>
    %49 = arith.index_cast %c0_i32_20 : i32 to index
    %c0_26 = arith.constant 0 : index
    %c0_27 = arith.constant 0 : index
    %50 = vector.load %arg7[%49, %c0_26, %c0_27] : memref<4x2x32xf32, #tpu.memory_space<vmem>>, vector<1x2x32xf32>
    %51 = vector.shape_cast %50 : vector<1x2x32xf32> to vector<2x32xf32>
    %52 = vector.shape_cast %48 : vector<2x32xf32> to vector<1x2x32xf32>
    tpu.vector_store %arg7[%49, %c0_26, %c0_27], %52 {strides = array<i32>} : memref<4x2x32xf32, #tpu.memory_space<vmem>>, vector<1x2x32xf32>,
    %53 = vector.extract_strided_slice %47 {offsets = [2, 0], sizes = [2, 32], strides = [1, 1]} : vector<4x32xf32> to vector<2x32xf32>
    %54 = arith.index_cast %c0_i32_20 : i32 to index
    %c0_28 = arith.constant 0 : index
    %c0_29 = arith.constant 0 : index
    %55 = vector.load %arg8[%54, %c0_28, %c0_29] : memref<4x2x32xf32, #tpu.memory_space<vmem>>, vector<1x2x32xf32>
    %56 = vector.shape_cast %55 : vector<1x2x32xf32> to vector<2x32xf32>
    %57 = vector.shape_cast %53 : vector<2x32xf32> to vector<1x2x32xf32>
    tpu.vector_store %arg8[%54, %c0_28, %c0_29], %57 {strides = array<i32>} : memref<4x2x32xf32, #tpu.memory_space<vmem>>, vector<1x2x32xf32>,
    %c1_i32 = arith.constant 1 : i32
    %c2_i32_30 = arith.constant 2 : i32
    %58 = arith.muli %c1_i32, %c2_i32_30 : i32
    %59 = tpu.assume_multiple %58, 2 : i32
    %c0_31 = arith.constant 0 : index
    %60 = arith.index_cast %59 : i32 to index
    %c0_32 = arith.constant 0 : index
    %61 = vector.load %arg10[%c0_31, %60, %c0_32] : memref<2x8x128xf32, #tpu.memory_space<vmem>>, vector<1x2x128xf32>
    %62 = vector.shape_cast %61 : vector<1x2x128xf32> to vector<2x128xf32>
    %c1_33 = arith.constant 1 : index
    %63 = arith.index_cast %59 : i32 to index
    %c0_34 = arith.constant 0 : index
    %64 = vector.load %arg10[%c1_33, %63, %c0_34] : memref<2x8x128xf32, #tpu.memory_space<vmem>>, vector<1x2x128xf32>
    %65 = vector.shape_cast %64 : vector<1x2x128xf32> to vector<2x128xf32>
    %66 = tpu.concatenate %62, %65 in 0 : vector<2x128xf32>, vector<2x128xf32> -> vector<4x128xf32>
    %67 = vector.extract_strided_slice %66 {offsets = [0, 0], sizes = [4, 32], strides = [1, 1]} : vector<4x128xf32> to vector<4x32xf32>
    %68 = vector.extract_strided_slice %66 {offsets = [0, 32], sizes = [4, 64], strides = [1, 1]} : vector<4x128xf32> to vector<4x64xf32>
    %69 = arith.negf %68 : vector<4x64xf32>
    %70 = math.exp %69 : vector<4x64xf32>
    %cst_35 = arith.constant 1.000000e+00 : f32
    %71 = vector.broadcast %cst_35 : f32 to vector<4x64xf32>
    %72 = arith.addf %71, %70 : vector<4x64xf32>
    %73 = arith.divf %71, %72 : vector<4x64xf32>
    %74 = vector.extract_strided_slice %73 {offsets = [0, 0], sizes = [4, 32], strides = [1, 1]} : vector<4x64xf32> to vector<4x32xf32>
    %75 = vector.extract_strided_slice %73 {offsets = [0, 32], sizes = [4, 32], strides = [1, 1]} : vector<4x64xf32> to vector<4x32xf32>
    %76 = vector.extract_strided_slice %66 {offsets = [0, 96], sizes = [4, 32], strides = [1, 1]} : vector<4x128xf32> to vector<4x32xf32>
    %77 = arith.subf %43, %67 : vector<4x32xf32>
    %78 = arith.mulf %74, %77 : vector<4x32xf32>
    %79 = arith.addf %67, %78 : vector<4x32xf32>
    %80 = math.tanh %79 : vector<4x32xf32>
    %81 = arith.subf %80, %76 : vector<4x32xf32>
    %82 = arith.mulf %75, %81 : vector<4x32xf32>
    %83 = arith.addf %76, %82 : vector<4x32xf32>
    %84 = vector.extract_strided_slice %83 {offsets = [0, 0], sizes = [2, 32], strides = [1, 1]} : vector<4x32xf32> to vector<2x32xf32>
    %85 = arith.index_cast %c1_i32 : i32 to index
    %c0_36 = arith.constant 0 : index
    %c0_37 = arith.constant 0 : index
    %86 = vector.load %arg7[%85, %c0_36, %c0_37] : memref<4x2x32xf32, #tpu.memory_space<vmem>>, vector<1x2x32xf32>
    %87 = vector.shape_cast %86 : vector<1x2x32xf32> to vector<2x32xf32>
    %88 = vector.shape_cast %84 : vector<2x32xf32> to vector<1x2x32xf32>
    tpu.vector_store %arg7[%85, %c0_36, %c0_37], %88 {strides = array<i32>} : memref<4x2x32xf32, #tpu.memory_space<vmem>>, vector<1x2x32xf32>,
    %89 = vector.extract_strided_slice %83 {offsets = [2, 0], sizes = [2, 32], strides = [1, 1]} : vector<4x32xf32> to vector<2x32xf32>
    %90 = arith.index_cast %c1_i32 : i32 to index
    %c0_38 = arith.constant 0 : index
    %c0_39 = arith.constant 0 : index
    %91 = vector.load %arg8[%90, %c0_38, %c0_39] : memref<4x2x32xf32, #tpu.memory_space<vmem>>, vector<1x2x32xf32>
    %92 = vector.shape_cast %91 : vector<1x2x32xf32> to vector<2x32xf32>
    %93 = vector.shape_cast %89 : vector<2x32xf32> to vector<1x2x32xf32>
    tpu.vector_store %arg8[%90, %c0_38, %c0_39], %93 {strides = array<i32>} : memref<4x2x32xf32, #tpu.memory_space<vmem>>, vector<1x2x32xf32>,
    %c2_i32_40 = arith.constant 2 : i32
    %c2_i32_41 = arith.constant 2 : i32
    %94 = arith.muli %c2_i32_40, %c2_i32_41 : i32
    %95 = tpu.assume_multiple %94, 2 : i32
    %c0_42 = arith.constant 0 : index
    %96 = arith.index_cast %95 : i32 to index
    %c0_43 = arith.constant 0 : index
    %97 = vector.load %arg10[%c0_42, %96, %c0_43] : memref<2x8x128xf32, #tpu.memory_space<vmem>>, vector<1x2x128xf32>
    %98 = vector.shape_cast %97 : vector<1x2x128xf32> to vector<2x128xf32>
    %c1_44 = arith.constant 1 : index
    %99 = arith.index_cast %95 : i32 to index
    %c0_45 = arith.constant 0 : index
    %100 = vector.load %arg10[%c1_44, %99, %c0_45] : memref<2x8x128xf32, #tpu.memory_space<vmem>>, vector<1x2x128xf32>
    %101 = vector.shape_cast %100 : vector<1x2x128xf32> to vector<2x128xf32>
    %102 = tpu.concatenate %98, %101 in 0 : vector<2x128xf32>, vector<2x128xf32> -> vector<4x128xf32>
    %103 = vector.extract_strided_slice %102 {offsets = [0, 0], sizes = [4, 32], strides = [1, 1]} : vector<4x128xf32> to vector<4x32xf32>
    %104 = vector.extract_strided_slice %102 {offsets = [0, 32], sizes = [4, 64], strides = [1, 1]} : vector<4x128xf32> to vector<4x64xf32>
    %105 = arith.negf %104 : vector<4x64xf32>
    %106 = math.exp %105 : vector<4x64xf32>
    %cst_46 = arith.constant 1.000000e+00 : f32
    %107 = vector.broadcast %cst_46 : f32 to vector<4x64xf32>
    %108 = arith.addf %107, %106 : vector<4x64xf32>
    %109 = arith.divf %107, %108 : vector<4x64xf32>
    %110 = vector.extract_strided_slice %109 {offsets = [0, 0], sizes = [4, 32], strides = [1, 1]} : vector<4x64xf32> to vector<4x32xf32>
    %111 = vector.extract_strided_slice %109 {offsets = [0, 32], sizes = [4, 32], strides = [1, 1]} : vector<4x64xf32> to vector<4x32xf32>
    %112 = vector.extract_strided_slice %102 {offsets = [0, 96], sizes = [4, 32], strides = [1, 1]} : vector<4x128xf32> to vector<4x32xf32>
    %113 = arith.subf %79, %103 : vector<4x32xf32>
    %114 = arith.mulf %110, %113 : vector<4x32xf32>
    %115 = arith.addf %103, %114 : vector<4x32xf32>
    %116 = math.tanh %115 : vector<4x32xf32>
    %117 = arith.subf %116, %112 : vector<4x32xf32>
    %118 = arith.mulf %111, %117 : vector<4x32xf32>
    %119 = arith.addf %112, %118 : vector<4x32xf32>
    %120 = vector.extract_strided_slice %119 {offsets = [0, 0], sizes = [2, 32], strides = [1, 1]} : vector<4x32xf32> to vector<2x32xf32>
    %121 = arith.index_cast %c2_i32_40 : i32 to index
    %c0_47 = arith.constant 0 : index
    %c0_48 = arith.constant 0 : index
    %122 = vector.load %arg7[%121, %c0_47, %c0_48] : memref<4x2x32xf32, #tpu.memory_space<vmem>>, vector<1x2x32xf32>
    %123 = vector.shape_cast %122 : vector<1x2x32xf32> to vector<2x32xf32>
    %124 = vector.shape_cast %120 : vector<2x32xf32> to vector<1x2x32xf32>
    tpu.vector_store %arg7[%121, %c0_47, %c0_48], %124 {strides = array<i32>} : memref<4x2x32xf32, #tpu.memory_space<vmem>>, vector<1x2x32xf32>,
    %125 = vector.extract_strided_slice %119 {offsets = [2, 0], sizes = [2, 32], strides = [1, 1]} : vector<4x32xf32> to vector<2x32xf32>
    %126 = arith.index_cast %c2_i32_40 : i32 to index
    %c0_49 = arith.constant 0 : index
    %c0_50 = arith.constant 0 : index
    %127 = vector.load %arg8[%126, %c0_49, %c0_50] : memref<4x2x32xf32, #tpu.memory_space<vmem>>, vector<1x2x32xf32>
    %128 = vector.shape_cast %127 : vector<1x2x32xf32> to vector<2x32xf32>
    %129 = vector.shape_cast %125 : vector<2x32xf32> to vector<1x2x32xf32>
    tpu.vector_store %arg8[%126, %c0_49, %c0_50], %129 {strides = array<i32>} : memref<4x2x32xf32, #tpu.memory_space<vmem>>, vector<1x2x32xf32>,
    %c3_i32 = arith.constant 3 : i32
    %c2_i32_51 = arith.constant 2 : i32
    %130 = arith.muli %c3_i32, %c2_i32_51 : i32
    %131 = tpu.assume_multiple %130, 2 : i32
    %c0_52 = arith.constant 0 : index
    %132 = arith.index_cast %131 : i32 to index
    %c0_53 = arith.constant 0 : index
    %133 = vector.load %arg10[%c0_52, %132, %c0_53] : memref<2x8x128xf32, #tpu.memory_space<vmem>>, vector<1x2x128xf32>
    %134 = vector.shape_cast %133 : vector<1x2x128xf32> to vector<2x128xf32>
    %c1_54 = arith.constant 1 : index
    %135 = arith.index_cast %131 : i32 to index
    %c0_55 = arith.constant 0 : index
    %136 = vector.load %arg10[%c1_54, %135, %c0_55] : memref<2x8x128xf32, #tpu.memory_space<vmem>>, vector<1x2x128xf32>
    %137 = vector.shape_cast %136 : vector<1x2x128xf32> to vector<2x128xf32>
    %138 = tpu.concatenate %134, %137 in 0 : vector<2x128xf32>, vector<2x128xf32> -> vector<4x128xf32>
    %139 = vector.extract_strided_slice %138 {offsets = [0, 0], sizes = [4, 32], strides = [1, 1]} : vector<4x128xf32> to vector<4x32xf32>
    %140 = vector.extract_strided_slice %138 {offsets = [0, 32], sizes = [4, 64], strides = [1, 1]} : vector<4x128xf32> to vector<4x64xf32>
    %141 = arith.negf %140 : vector<4x64xf32>
    %142 = math.exp %141 : vector<4x64xf32>
    %cst_56 = arith.constant 1.000000e+00 : f32
    %143 = vector.broadcast %cst_56 : f32 to vector<4x64xf32>
    %144 = arith.addf %143, %142 : vector<4x64xf32>
    %145 = arith.divf %143, %144 : vector<4x64xf32>
    %146 = vector.extract_strided_slice %145 {offsets = [0, 0], sizes = [4, 32], strides = [1, 1]} : vector<4x64xf32> to vector<4x32xf32>
    %147 = vector.extract_strided_slice %145 {offsets = [0, 32], sizes = [4, 32], strides = [1, 1]} : vector<4x64xf32> to vector<4x32xf32>
    %148 = vector.extract_strided_slice %138 {offsets = [0, 96], sizes = [4, 32], strides = [1, 1]} : vector<4x128xf32> to vector<4x32xf32>
    %149 = arith.subf %115, %139 : vector<4x32xf32>
    %150 = arith.mulf %146, %149 : vector<4x32xf32>
    %151 = arith.addf %139, %150 : vector<4x32xf32>
    %152 = math.tanh %151 : vector<4x32xf32>
    %153 = arith.subf %152, %148 : vector<4x32xf32>
    %154 = arith.mulf %147, %153 : vector<4x32xf32>
    %155 = arith.addf %148, %154 : vector<4x32xf32>
    %156 = vector.extract_strided_slice %155 {offsets = [0, 0], sizes = [2, 32], strides = [1, 1]} : vector<4x32xf32> to vector<2x32xf32>
    %157 = arith.index_cast %c3_i32 : i32 to index
    %c0_57 = arith.constant 0 : index
    %c0_58 = arith.constant 0 : index
    %158 = vector.load %arg7[%157, %c0_57, %c0_58] : memref<4x2x32xf32, #tpu.memory_space<vmem>>, vector<1x2x32xf32>
    %159 = vector.shape_cast %158 : vector<1x2x32xf32> to vector<2x32xf32>
    %160 = vector.shape_cast %156 : vector<2x32xf32> to vector<1x2x32xf32>
    tpu.vector_store %arg7[%157, %c0_57, %c0_58], %160 {strides = array<i32>} : memref<4x2x32xf32, #tpu.memory_space<vmem>>, vector<1x2x32xf32>,
    %161 = vector.extract_strided_slice %155 {offsets = [2, 0], sizes = [2, 32], strides = [1, 1]} : vector<4x32xf32> to vector<2x32xf32>
    %162 = arith.index_cast %c3_i32 : i32 to index
    %c0_59 = arith.constant 0 : index
    %c0_60 = arith.constant 0 : index
    %163 = vector.load %arg8[%162, %c0_59, %c0_60] : memref<4x2x32xf32, #tpu.memory_space<vmem>>, vector<1x2x32xf32>
    %164 = vector.shape_cast %163 : vector<1x2x32xf32> to vector<2x32xf32>
    %165 = vector.shape_cast %161 : vector<2x32xf32> to vector<1x2x32xf32>
    tpu.vector_store %arg8[%162, %c0_59, %c0_60], %165 {strides = array<i32>} : memref<4x2x32xf32, #tpu.memory_space<vmem>>, vector<1x2x32xf32>,
    %c4_i32 = arith.constant 4 : i32
    %c0_61 = arith.constant 0 : index
    %c0_62 = arith.constant 0 : index
    %166 = vector.load %arg11[%c0_61, %c0_62] : memref<4x32xf32, #tpu.memory_space<vmem>>, vector<4x32xf32>
    tpu.vector_store %arg11[%c0_61, %c0_62], %151 {strides = array<i32>} : memref<4x32xf32, #tpu.memory_space<vmem>>, vector<4x32xf32>,
    %c0_63 = arith.constant 0 : index
    %c0_64 = arith.constant 0 : index
    %167 = vector.load %arg9[%c0_63, %c0_64] : memref<4x32xf32, #tpu.memory_space<vmem>>, vector<4x32xf32>
    tpu.vector_store %arg9[%c0_63, %c0_64], %151 {strides = array<i32>} : memref<4x32xf32, #tpu.memory_space<vmem>>, vector<4x32xf32>,
    return
  }
  func.func @transform_0(%arg0: i32) -> (i32, i32) {
    %c0_i32 = arith.constant 0 : i32
    %c0_i32_0 = arith.constant 0 : i32
    return %arg0, %c0_i32 : i32, i32
  }
  func.func @transform_1(%arg0: i32) -> (i32, i32) {
    %c0_i32 = arith.constant 0 : i32
    %c0_i32_0 = arith.constant 0 : i32
    return %arg0, %c0_i32 : i32, i32
  }
  func.func @transform_2(%arg0: i32) -> (i32, i32) {
    %c0_i32 = arith.constant 0 : i32
    %c0_i32_0 = arith.constant 0 : i32
    %c0_i32_1 = arith.constant 0 : i32
    return %c0_i32, %c0_i32_0 : i32, i32
  }
  func.func @transform_3(%arg0: i32) -> (i32, i32) {
    %c0_i32 = arith.constant 0 : i32
    %c0_i32_0 = arith.constant 0 : i32
    %c0_i32_1 = arith.constant 0 : i32
    return %c0_i32, %c0_i32_0 : i32, i32
  }
  func.func @transform_4(%arg0: i32) -> (i32, i32) {
    %c0_i32 = arith.constant 0 : i32
    %c0_i32_0 = arith.constant 0 : i32
    %c0_i32_1 = arith.constant 0 : i32
    return %c0_i32, %c0_i32_0 : i32, i32
  }
  func.func @transform_5(%arg0: i32) -> (i32, i32) {
    %c0_i32 = arith.constant 0 : i32
    %c0_i32_0 = arith.constant 0 : i32
    %c0_i32_1 = arith.constant 0 : i32
    return %c0_i32, %c0_i32_0 : i32, i32
  }
  func.func @transform_6(%arg0: i32) -> (i32, i32, i32) {
    %c0_i32 = arith.constant 0 : i32
    %c0_i32_0 = arith.constant 0 : i32
    %c0_i32_1 = arith.constant 0 : i32
    return %arg0, %c0_i32, %c0_i32_0 : i32, i32, i32
  }
  func.func @transform_7(%arg0: i32) -> (i32, i32, i32) {
    %c0_i32 = arith.constant 0 : i32
    %c0_i32_0 = arith.constant 0 : i32
    %c0_i32_1 = arith.constant 0 : i32
    return %arg0, %c0_i32, %c0_i32_0 : i32, i32, i32
  }
  func.func @transform_8(%arg0: i32) -> (i32, i32) {
    %c0_i32 = arith.constant 0 : i32
    %c0_i32_0 = arith.constant 0 : i32
    %c0_i32_1 = arith.constant 0 : i32
    return %c0_i32, %c0_i32_0 : i32, i32
  }
}

</mosaic_0001>

<llo_original>
// kernel: encoder_forward.2
$region0: #{encoder_forward.2}
  #allocation0 [shape = 'u32[]', space=smem, size = 0x4, offset = 0x4, fixed_abs, tag = 'smem constant byte address 0x4 - core index']
  #allocation1 [shape = 'u32[144,128]{1,0:T(1,128)}', space=vmem, size = 0x12000, scoped, tag = 'internal scratch']
  #allocation2 [shape = 'f32[2,8,128]{2,1,0:T(8,128)}', space=vmem, size = 0x2000, scoped, tag = 'scratch operand']
  #allocation3 [shape = 'f32[4,32]{1,0:T(4,128)}', space=vmem, size = 0x800, scoped, tag = 'scratch operand']
  %s0 = inlined_call_operand.vmem [shape: bf16[16,32], index: 0, kind: input, shape index: {}]
  %s1 = inlined_call_operand.vmem [shape: bf16[16,32], index: 1, kind: input, shape index: {}]
  %s2 = inlined_call_operand.vmem [shape: bf16[32,128], index: 2, kind: input, shape index: {}]
  %s3 = inlined_call_operand.vmem [shape: bf16[32,128], index: 3, kind: input, shape index: {}]
  %s4 = inlined_call_operand.vmem [shape: f32[1,128], index: 4, kind: input, shape index: {}]
  %s5 = inlined_call_operand.vmem [shape: f32[1,128], index: 5, kind: input, shape index: {}]
  %s6 = inlined_call_operand.vmem [shape: f32[8,2,32], index: 6, kind: output, shape index: {0}]
  %s7 = inlined_call_operand.vmem [shape: f32[8,2,32], index: 7, kind: output, shape index: {1}]
  %s8 = inlined_call_operand.vmem [shape: f32[4,32], index: 8, kind: output, shape index: {2}]
  %9 = xla_tuple %s6, %s7, %s8
  %s10 = sld [smem:[#allocation0]]
  $region77: #{encoder_forward.2} parent=0
    _
  %s12 = ssub.s32 1, %s10
  %s13 = scalar_select 0, %s12, %s10
  loop: start=0, step=1, limit=4
  $region2: #{encoder_forward.2} parent=0 // loop_pre_header
    _
  $region3: #{encoder_forward.2} parent=0 // loop_header
    %s15 = sphi 0, %s19
    %p16 = scmp.ge.s32.totalorder %s15, 4
    %s25 = sphi 0, %s27
    %s28 = sphi 0, %s25
    %s29 = sphi 0, %s28
    %s45 = sphi 0, %s29
    %s51 = sphi 0, %s53
    %s54 = sphi 0, %s51
    %s55 = sphi 0, %s54
    %s71 = sphi 0, %s55
    %s75 = sphi 0, %s75
    %s77 = sphi 0, %s75
    %s78 = sphi 0, %s77
    %s92 = sphi 0, %s78
    %s96 = sphi 0, %s96
    %s98 = sphi 0, %s96
    %s99 = sphi 0, %s98
    %s113 = sphi 0, %s99
    %s117 = sphi 0, %s117
    %s119 = sphi 0, %s117
    %s120 = sphi 0, %s119
    %s134 = sphi 0, %s120
    %s138 = sphi 0, %s138
    %s140 = sphi 0, %s138
    %s141 = sphi 0, %s140
    %s155 = sphi 0, %s141
    %s161 = sphi 0, %s163
    %s164 = sphi 0, %s161
    %s165 = sphi 0, %s164
    %s181 = sphi 0, %s165
    %s187 = sphi 0, %s189
    %s190 = sphi 0, %s187
    %s191 = sphi 0, %s190
    %s207 = sphi 0, %s191
    %s211 = sphi 0, %s211
    %s213 = sphi 0, %s211
    %s214 = sphi 0, %s213
    %s228 = sphi 0, %s214
  $region4: #{encoder_forward.2} parent=0 // loop_header_branch
    %18 = sbr.rel (%p16) target = $region8
  $region5: #{encoder_forward.2} parent=0 // loop_body
    %s20 = ssub.s32 %s15, 1
    %s21 = ssub.s32 %s15, 2
    %s22 = sadd.s32 %s15, 1
    %s23 = ssub.s32 %s15, %s22
    %p24 = scmp.eq.s32.totalorder %s23, 0
    %s26 = sadd.s32 %s25, 1
    %s27 = scalar_select %p24, %s25, %s26
    %p30 = pneg %p24
    %p31 = scmp.eq.s32.totalorder %s15, 1
    %p32 = por %p30, %p31
    %p33 = scmp.ne.s32.totalorder %s25, %s28
    %p34 = scmp.eq.s32.totalorder %s15, 0
    %p35 = por %p33, %p34
    %p36 = scmp.ne.s32.totalorder %s25, %s28
    %p37 = scmp.eq.s32.totalorder %s20, 1
    %p38 = por %p36, %p37
    %p39 = scmp.ne.s32.totalorder %s28, %s29
    %p40 = scmp.eq.s32.totalorder %s20, 0
    %p41 = por %p39, %p40
    %p42 = scmp.ne.s32.totalorder %s28, %s29
    %p43 = scmp.eq.s32.totalorder %s21, 1
    %p44 = por %p42, %p43
    %p46 = scmp.ne.s32.totalorder %s29, %s45
    %p47 = scmp.eq.s32.totalorder %s21, 0
    %p48 = por %p46, %p47
    %s49 = ssub.s32 %s15, %s22
    %p50 = scmp.eq.s32.totalorder %s49, 0
    %s52 = sadd.s32 %s51, 1
    %s53 = scalar_select %p50, %s51, %s52
    %p56 = pneg %p50
    %p57 = scmp.eq.s32.totalorder %s15, 1
    %p58 = por %p56, %p57
    %p59 = scmp.ne.s32.totalorder %s51, %s54
    %p60 = scmp.eq.s32.totalorder %s15, 0
    %p61 = por %p59, %p60
    %p62 = scmp.ne.s32.totalorder %s51, %s54
    %p63 = scmp.eq.s32.totalorder %s20, 1
    %p64 = por %p62, %p63
    %p65 = scmp.ne.s32.totalorder %s54, %s55
    %p66 = scmp.eq.s32.totalorder %s20, 0
    %p67 = por %p65, %p66
    %p68 = scmp.ne.s32.totalorder %s54, %s55
    %p69 = scmp.eq.s32.totalorder %s21, 1
    %p70 = por %p68, %p69
    %p72 = scmp.ne.s32.totalorder %s55, %s71
    %p73 = scmp.eq.s32.totalorder %s21, 0
    %p74 = por %p72, %p73
    %s76 = sadd.s32 %s75, 1
    %p79 = scmp.eq.s32.totalorder %s15, 1
    %p80 = scmp.ne.s32.totalorder %s75, %s77
    %p81 = scmp.eq.s32.totalorder %s15, 0
    %p82 = por %p80, %p81
    %p83 = scmp.ne.s32.totalorder %s75, %s77
    %p84 = scmp.eq.s32.totalorder %s20, 1
    %p85 = por %p83, %p84
    %p86 = scmp.ne.s32.totalorder %s77, %s78
    %p87 = scmp.eq.s32.totalorder %s20, 0
    %p88 = por %p86, %p87
    %p89 = scmp.ne.s32.totalorder %s77, %s78
    %p90 = scmp.eq.s32.totalorder %s21, 1
    %p91 = por %p89, %p90
    %p93 = scmp.ne.s32.totalorder %s78, %s92
    %p94 = scmp.eq.s32.totalorder %s21, 0
    %p95 = por %p93, %p94
    %s97 = sadd.s32 %s96, 1
    %p100 = scmp.eq.s32.totalorder %s15, 1
    %p101 = scmp.ne.s32.totalorder %s96, %s98
    %p102 = scmp.eq.s32.totalorder %s15, 0
    %p103 = por %p101, %p102
    %p104 = scmp.ne.s32.totalorder %s96, %s98
    %p105 = scmp.eq.s32.totalorder %s20, 1
    %p106 = por %p104, %p105
    %p107 = scmp.ne.s32.totalorder %s98, %s99
    %p108 = scmp.eq.s32.totalorder %s20, 0
    %p109 = por %p107, %p108
    %p110 = scmp.ne.s32.totalorder %s98, %s99
    %p111 = scmp.eq.s32.totalorder %s21, 1
    %p112 = por %p110, %p111
    %p114 = scmp.ne.s32.totalorder %s99, %s113
    %p115 = scmp.eq.s32.totalorder %s21, 0
    %p116 = por %p114, %p115
    %s118 = sadd.s32 %s117, 1
    %p121 = scmp.eq.s32.totalorder %s15, 1
    %p122 = scmp.ne.s32.totalorder %s117, %s119
    %p123 = scmp.eq.s32.totalorder %s15, 0
    %p124 = por %p122, %p123
    %p125 = scmp.ne.s32.totalorder %s117, %s119
    %p126 = scmp.eq.s32.totalorder %s20, 1
    %p127 = por %p125, %p126
    %p128 = scmp.ne.s32.totalorder %s119, %s120
    %p129 = scmp.eq.s32.totalorder %s20, 0
    %p130 = por %p128, %p129
    %p131 = scmp.ne.s32.totalorder %s119, %s120
    %p132 = scmp.eq.s32.totalorder %s21, 1
    %p133 = por %p131, %p132
    %p135 = scmp.ne.s32.totalorder %s120, %s134
    %p136 = scmp.eq.s32.totalorder %s21, 0
    %p137 = por %p135, %p136
    %s139 = sadd.s32 %s138, 1
    %p142 = scmp.eq.s32.totalorder %s15, 1
    %p143 = scmp.ne.s32.totalorder %s138, %s140
    %p144 = scmp.eq.s32.totalorder %s15, 0
    %p145 = por %p143, %p144
    %p146 = scmp.ne.s32.totalorder %s138, %s140
    %p147 = scmp.eq.s32.totalorder %s20, 1
    %p148 = por %p146, %p147
    %p149 = scmp.ne.s32.totalorder %s140, %s141
    %p150 = scmp.eq.s32.totalorder %s20, 0
    %p151 = por %p149, %p150
    %p152 = scmp.ne.s32.totalorder %s140, %s141
    %p153 = scmp.eq.s32.totalorder %s21, 1
    %p154 = por %p152, %p153
    %p156 = scmp.ne.s32.totalorder %s141, %s155
    %p157 = scmp.eq.s32.totalorder %s21, 0
    %p158 = por %p156, %p157
    %s159 = ssub.s32 %s15, %s22
    %p160 = scmp.eq.s32.totalorder %s159, 0
    %s162 = sadd.s32 %s161, 1
    %s163 = scalar_select %p160, %s161, %s162
    %p166 = pneg %p160
    %p167 = scmp.eq.s32.totalorder %s15, 1
    %p168 = por %p166, %p167
    %p169 = scmp.ne.s32.totalorder %s161, %s164
    %p170 = scmp.eq.s32.totalorder %s15, 0
    %p171 = por %p169, %p170
    %p172 = scmp.ne.s32.totalorder %s161, %s164
    %p173 = scmp.eq.s32.totalorder %s20, 1
    %p174 = por %p172, %p173
    %p175 = scmp.ne.s32.totalorder %s164, %s165
    %p176 = scmp.eq.s32.totalorder %s20, 0
    %p177 = por %p175, %p176
    %p178 = scmp.ne.s32.totalorder %s164, %s165
    %p179 = scmp.eq.s32.totalorder %s21, 1
    %p180 = por %p178, %p179
    %p182 = scmp.ne.s32.totalorder %s165, %s181
    %p183 = scmp.eq.s32.totalorder %s21, 0
    %p184 = por %p182, %p183
    %s185 = ssub.s32 %s15, %s22
    %p186 = scmp.eq.s32.totalorder %s185, 0
    %s188 = sadd.s32 %s187, 1
    %s189 = scalar_select %p186, %s187, %s188
    %p192 = pneg %p186
    %p193 = scmp.eq.s32.totalorder %s15, 1
    %p194 = por %p192, %p193
    %p195 = scmp.ne.s32.totalorder %s187, %s190
    %p196 = scmp.eq.s32.totalorder %s15, 0
    %p197 = por %p195, %p196
    %p198 = scmp.ne.s32.totalorder %s187, %s190
    %p199 = scmp.eq.s32.totalorder %s20, 1
    %p200 = por %p198, %p199
    %p201 = scmp.ne.s32.totalorder %s190, %s191
    %p202 = scmp.eq.s32.totalorder %s20, 0
    %p203 = por %p201, %p202
    %p204 = scmp.ne.s32.totalorder %s190, %s191
    %p205 = scmp.eq.s32.totalorder %s21, 1
    %p206 = por %p204, %p205
    %p208 = scmp.ne.s32.totalorder %s191, %s207
    %p209 = scmp.eq.s32.totalorder %s21, 0
    %p210 = por %p208, %p209
    %s212 = sadd.s32 %s211, 1
    %p215 = scmp.eq.s32.totalorder %s15, 1
    %p216 = scmp.ne.s32.totalorder %s211, %s213
    %p217 = scmp.eq.s32.totalorder %s15, 0
    %p218 = por %p216, %p217
    %p219 = scmp.ne.s32.totalorder %s211, %s213
    %p220 = scmp.eq.s32.totalorder %s20, 1
    %p221 = por %p219, %p220
    %p222 = scmp.ne.s32.totalorder %s213, %s214
    %p223 = scmp.eq.s32.totalorder %s20, 0
    %p224 = por %p222, %p223
    %p225 = scmp.ne.s32.totalorder %s213, %s214
    %p226 = scmp.eq.s32.totalorder %s21, 1
    %p227 = por %p225, %p226
    %p229 = scmp.ne.s32.totalorder %s214, %s228
    %p230 = scmp.eq.s32.totalorder %s21, 0
    %p231 = por %p229, %p230
    %p232 = scmp.le.s32.totalorder 1, %s15
    %p233 = scmp.lt.s32.totalorder %s15, 3
    %p234 = pnand %p232, %p233
    %p235 = pneg %p234
    // Predicated region
    $region9: #{encoder_forward.2} parent=5 // pred_check
      _
    $region10: #{encoder_forward.2} parent=5 // pred_check_branch
      %237 = sbr.rel (%p234) target = $region12
    $region11: #{encoder_forward.2} parent=5 // pred_region
      %s238 = ssub.s32 %s15, 1
      // Predicated region
      $region13: #{encoder_forward.2} parent=11 // pred_check
        %p239 = pneg %p88
      $region14: #{encoder_forward.2} parent=11 // pred_check_branch
        %241 = sbr.rel (%p239) target = $region16
      $region15: #{encoder_forward.2} parent=11 // pred_region
        _
      $region16: #{encoder_forward.2} parent=11 // pred_fallthru
        _
      // Predicated region
      $region17: #{encoder_forward.2} parent=11 // pred_check
        %p242 = pneg %p109
      $region18: #{encoder_forward.2} parent=11 // pred_check_branch
        %244 = sbr.rel (%p242) target = $region20
      $region19: #{encoder_forward.2} parent=11 // pred_region
        _
      $region20: #{encoder_forward.2} parent=11 // pred_fallthru
        _
      // Predicated region
      $region21: #{encoder_forward.2} parent=11 // pred_check
        %p245 = pneg %p130
      $region22: #{encoder_forward.2} parent=11 // pred_check_branch
        %247 = sbr.rel (%p245) target = $region24
      $region23: #{encoder_forward.2} parent=11 // pred_region
        _
      $region24: #{encoder_forward.2} parent=11 // pred_fallthru
        _
      // Predicated region
      $region25: #{encoder_forward.2} parent=11 // pred_check
        %p248 = pneg %p151
      $region26: #{encoder_forward.2} parent=11 // pred_check_branch
        %250 = sbr.rel (%p248) target = $region28
      $region27: #{encoder_forward.2} parent=11 // pred_region
        _
      $region28: #{encoder_forward.2} parent=11 // pred_fallthru
        _
    $region12: #{encoder_forward.2} parent=5 // pred_fallthru
      _
    %p251 = scmp.lt.s32.totalorder %s15, 2
    // Predicated region
    $region29: #{encoder_forward.2} parent=5 // pred_check
      %p252 = pneg %p251
    $region30: #{encoder_forward.2} parent=5 // pred_check_branch
      %254 = sbr.rel (%p252) target = $region32
    $region31: #{encoder_forward.2} parent=5 // pred_region
      // Predicated region
      $region33: #{encoder_forward.2} parent=31 // pred_check
        %p255 = pneg %p35
      $region34: #{encoder_forward.2} parent=31 // pred_check_branch
        %257 = sbr.rel (%p255) target = $region36
      $region35: #{encoder_forward.2} parent=31 // pred_region
        %p258 = scmp.lt.s32.totalorder %s15, 1
        %s259 = scalar_select %p258, %s15, 1
        %s260 = smul.addr %s259, 4
        %s261 = scalar_lea.vmem %s0, %s260
      $region36: #{encoder_forward.2} parent=31 // pred_fallthru
        _
      // Predicated region
      $region37: #{encoder_forward.2} parent=31 // pred_check
        %p262 = pneg %p61
      $region38: #{encoder_forward.2} parent=31 // pred_check_branch
        %264 = sbr.rel (%p262) target = $region40
      $region39: #{encoder_forward.2} parent=31 // pred_region
        %p265 = scmp.lt.s32.totalorder %s15, 1
        %s266 = scalar_select %p265, %s15, 1
        %s267 = smul.addr %s266, 4
        %s268 = scalar_lea.vmem %s1, %s267
      $region40: #{encoder_forward.2} parent=31 // pred_fallthru
        _
    $region32: #{encoder_forward.2} parent=5 // pred_fallthru
      _
    %p269 = scmp.le.s32.totalorder 1, %s15
    %p270 = scmp.lt.s32.totalorder %s15, 3
    %p271 = pnand %p269, %p270
    %p272 = pneg %p271
    // Predicated region
    $region41: #{encoder_forward.2} parent=5 // pred_check
      _
    $region42: #{encoder_forward.2} parent=5 // pred_check_branch
      %274 = sbr.rel (%p271) target = $region44
    $region43: #{encoder_forward.2} parent=5 // pred_region
      %s275 = ssub.s32 %s15, 1
      %p276 = scmp.lt.s32.totalorder %s20, 1
      %s277 = scalar_select %p276, %s20, 1
      %s278 = smul.addr %s277, 4
      %s279 = scalar_lea.vmem %s0, %s278
      %p280 = pneg %p41
      %p281 = pneg %p38
      %p282 = scmp.lt.s32.totalorder %s20, 1
      %s283 = scalar_select %p282, %s20, 1
      %s284 = smul.addr %s283, 4
      %s285 = scalar_lea.vmem %s1, %s284
      %p286 = pneg %p67
      %p287 = pneg %p64
      %p288 = pneg %p88
      %p289 = pneg %p85
      %p290 = pneg %p109
      %p291 = pneg %p106
      %p292 = pneg %p130
      %p293 = pneg %p127
      %p294 = pneg %p151
      %p295 = pneg %p148
      %p296 = pneg %p177
      %p297 = pneg %p174
      %s298 = smul.u32 4, %s20
      %p299 = scmp.lt.s32.totalorder %s298, 7
      %s300 = scalar_select %p299, %s298, 7
      %s301 = smul.addr %s300, 2
      %s302 = scalar_lea.vmem %s6, %s301
      %p303 = pneg %p203
      %p304 = pneg %p200
      %s305 = smul.u32 4, %s20
      %p306 = scmp.lt.s32.totalorder %s305, 7
      %s307 = scalar_select %p306, %s305, 7
      %s308 = smul.addr %s307, 2
      %s309 = scalar_lea.vmem %s7, %s308
      %p310 = pneg %p224
      %p311 = pneg %p221
      %p312 = scmp.lt.s32.totalorder %s20, 1
      %s313 = scalar_select %p312, %s20, 1
      %s314 = smul.addr %s313, 4
      %s315 = scalar_lea.vmem %s0, %s314
      %p316 = scmp.lt.s32.totalorder %s20, 1
      %s317 = scalar_select %p316, %s20, 1
      %s318 = smul.addr %s317, 4
      %s319 = scalar_lea.vmem %s1, %s318
      %s320 = smul.u32 4, %s20
      %p321 = scmp.lt.s32.totalorder %s320, 7
      %s322 = scalar_select %p321, %s320, 7
      %s323 = smul.addr %s322, 2
      %s324 = scalar_lea.vmem %s6, %s323
      %s325 = smul.u32 4, %s20
      %s326 = smul.u32 4, %s20
      %p327 = scmp.lt.s32.totalorder %s326, 7
      %s328 = scalar_select %p327, %s326, 7
      %s329 = smul.addr %s328, 2
      %s330 = scalar_lea.vmem %s7, %s329
      %s331 = smul.u32 4, %s20
      %p333 = scmp.eq.s32.totalorder %s20, 0
      // Predicated region
      $region45: #{encoder_forward.2} parent=43 // pred_check
        %p334 = pneg %p333
      $region46: #{encoder_forward.2} parent=43 // pred_check_branch
        %336 = sbr.rel (%p334) target = $region48
      $region47: #{encoder_forward.2} parent=43 // pred_region
        %vm337 = vcmask 257024
        %338 = vst.msk [vmem:[#allocation3] sm:$0xf] %vm337, 0.0
      $region48: #{encoder_forward.2} parent=43 // pred_fallthru
        _
      %v339 = vld [vmem:[%s315] sm:$0xf]
      %v340 = vld [vmem:[%s2] sm:$0xf]
      %v341 = vld [vmem:[%s2 + $0x4] sm:$0xf]
      %v342 = vld [vmem:[%s2 + $0x8] sm:$0xf]
      %v343 = vld [vmem:[%s2 + $0xc] sm:$0xf]
      %v344 = vld [vmem:[%s4] sm:$0x1]
      %v346 = vlaneseq
      %v347 = vshrl.u32 %v346, 7
      %v348 = vsub.s32 0, %v347
      %v349 = vrot.slane %v344, %v348
      %v355 = vunpack.c.l.b16 %v340
      %v356 = vunpack.c.l.b16 %v341
      %v357 = vunpack.c.l.b16 %v342
      %v358 = vunpack.c.l.b16 %v343
      %v359 = vpack.c.b16 %v356, %v355
      %v360 = vpack.c.b16 %v358, %v357
      %vm363 = vcmask 261120
      %v365 = vsel %vm363, %v339, 0
      %367 = vmatprep.subr.bf16.mxu0 0
      %368 = vmatpush1.bf16.msra.mxu0 %v359
      %369 = vmatprep.subr.bf16.mxu0 0
      %370 = vmatpush1.bf16.msra.mxu0 %v360
      %371 = vmatprep.subr.bf16.mxu0 0
      %372 = vmatpush1.bf16.msra.mxu0 0
      %373 = vmatprep.subr.bf16.mxu0 0
      %374 = vmatpush1.bf16.msra.mxu0 0
      %375 = vmatprep.subr.bf16.mxu0 0
      %376 = vmatpush1.bf16.msra.mxu0 0
      %377 = vmatprep.subr.bf16.mxu0 0
      %378 = vmatpush1.bf16.msra.mxu0 0
      %379 = vmatprep.subr.bf16.mxu0 0
      %380 = vmatpush1.bf16.msra.mxu0 0
      %381 = vmatprep.subr.bf16.mxu0 0
      %382 = vmatpush1.bf16.msra.mxu0 0
      %383 = vmatprep.subr.bf16.mxu0 0
      %384 = vmatpush1.bf16.msra.mxu0 0
      %385 = vmatprep.subr.bf16.mxu0 0
      %386 = vmatpush1.bf16.msra.mxu0 0
      %387 = vmatprep.subr.bf16.mxu0 0
      %388 = vmatpush1.bf16.msra.mxu0 0
      %389 = vmatprep.subr.bf16.mxu0 0
      %390 = vmatpush1.bf16.msra.mxu0 0
      %391 = vmatprep.subr.bf16.mxu0 0
      %392 = vmatpush1.bf16.msra.mxu0 0
      %393 = vmatprep.subr.bf16.mxu0 0
      %394 = vmatpush1.bf16.msra.mxu0 0
      %395 = vmatprep.subr.bf16.mxu0 0
      %396 = vmatpush1.bf16.msra.mxu0 0
      %397 = vmatprep.subr.bf16.mxu0 0
      %398 = vmatpush1.bf16.msra.mxu0 0
      %399 = vmatprep.mubr.bf16.mxu0 0
      %400 = vmatmul.mubr.bf16.gmra.mrb[0].mxu0 %v365
      %v401 = vpop.f32.mrb[0].mxu0
      %v402 = vadd.f32 %v349, %v401
      %v403 = vpop.f32.mrb[0].mxu0
      %v404 = vpop.f32.mrb[0].mxu0
      %v405 = vpop.f32.mrb[0].mxu0
      %406 = vdwg.mxu0
      %407 = vst [vmem:[#allocation2] sm:$0xff] %v402
      %v408 = vld [vmem:[%s319] sm:$0xf]
      %v409 = vld [vmem:[%s3] sm:$0xf]
      %v410 = vld [vmem:[%s3 + $0x4] sm:$0xf]
      %v411 = vld [vmem:[%s3 + $0x8] sm:$0xf]
      %v412 = vld [vmem:[%s3 + $0xc] sm:$0xf]
      %v413 = vld [vmem:[%s5] sm:$0x1]
      %v415 = vlaneseq
      %v416 = vshrl.u32 %v415, 7
      %v417 = vsub.s32 0, %v416
      %v418 = vrot.slane %v413, %v417
      %v424 = vunpack.c.l.b16 %v409
      %v425 = vunpack.c.l.b16 %v410
      %v426 = vunpack.c.l.b16 %v411
      %v427 = vunpack.c.l.b16 %v412
      %v428 = vpack.c.b16 %v425, %v424
      %v429 = vpack.c.b16 %v427, %v426
      %v433 = vsel %vm363, %v408, 0
      %435 = vmatprep.subr.bf16.mxu0 0
      %436 = vmatpush1.bf16.msra.mxu0 %v428
      %437 = vmatprep.subr.bf16.mxu0 0
      %438 = vmatpush1.bf16.msra.mxu0 %v429
      %439 = vmatprep.subr.bf16.mxu0 0
      %440 = vmatpush1.bf16.msra.mxu0 0
      %441 = vmatprep.subr.bf16.mxu0 0
      %442 = vmatpush1.bf16.msra.mxu0 0
      %443 = vmatprep.subr.bf16.mxu0 0
      %444 = vmatpush1.bf16.msra.mxu0 0
      %445 = vmatprep.subr.bf16.mxu0 0
      %446 = vmatpush1.bf16.msra.mxu0 0
      %447 = vmatprep.subr.bf16.mxu0 0
      %448 = vmatpush1.bf16.msra.mxu0 0
      %449 = vmatprep.subr.bf16.mxu0 0
      %450 = vmatpush1.bf16.msra.mxu0 0
      %451 = vmatprep.subr.bf16.mxu0 0
      %452 = vmatpush1.bf16.msra.mxu0 0
      %453 = vmatprep.subr.bf16.mxu0 0
      %454 = vmatpush1.bf16.msra.mxu0 0
      %455 = vmatprep.subr.bf16.mxu0 0
      %456 = vmatpush1.bf16.msra.mxu0 0
      %457 = vmatprep.subr.bf16.mxu0 0
      %458 = vmatpush1.bf16.msra.mxu0 0
      %459 = vmatprep.subr.bf16.mxu0 0
      %460 = vmatpush1.bf16.msra.mxu0 0
      %461 = vmatprep.subr.bf16.mxu0 0
      %462 = vmatpush1.bf16.msra.mxu0 0
      %463 = vmatprep.subr.bf16.mxu0 0
      %464 = vmatpush1.bf16.msra.mxu0 0
      %465 = vmatprep.subr.bf16.mxu0 0
      %466 = vmatpush1.bf16.msra.mxu0 0
      %467 = vmatprep.mubr.bf16.mxu0 0
      %468 = vmatmul.mubr.bf16.gmra.mrb[0].mxu0 %v433
      %v469 = vpop.f32.mrb[0].mxu0
      %v470 = vadd.f32 %v418, %v469
      %v471 = vpop.f32.mrb[0].mxu0
      %v472 = vpop.f32.mrb[0].mxu0
      %v473 = vpop.f32.mrb[0].mxu0
      %474 = vdwg.mxu0
      %s475 = scalar_lea.vmem [#allocation2], 8
      %476 = vst [vmem:[%s475] sm:$0xff] %v470
      %v477 = vld [vmem:[#allocation3] sm:$0xf]
      %v478 = vld [vmem:[#allocation2] sm:$0x3]
      %s479 = sadd.s32 0, 8
      %s480 = scalar_lea.vmem [#allocation2], %s479
      %v481 = vld [vmem:[%s480] sm:$0x3]
      %v483 = vrot.slane %v481, 6
      %vm485 = vcmask 1041408
      %v486 = vsel %vm485, %v478, %v483
      %v487 = vxor.u32 %v486, 2147483648
      %v488 = vmul.f32 %v487, 1.442695
      %v489 = vpow.pop %v488
      %v490 = vadd.f32 %v489, 1.0
      %v491 = vrcp.pop %v490
      %v492 = vmul.f32 1.0, %v491
      %v493 = vsub.f32 %v477, %v486
      %495 = vrot.lane.b32.xlu0 %v493, 32
      %v496 = vpop.permute.xlu0 %495
      %v498 = vmul.f32 %v492, %v496
      %500 = vrot.lane.b32.xlu0 %v498, 96
      %v501 = vpop.permute.xlu0 %500
      %v503 = vadd.f32 %v486, %v501
      %v504 = vtanh.pop %v503
      %506 = vrot.lane.b32.xlu0 %v486, 32
      %v507 = vpop.permute.xlu0 %506
      %v509 = vsub.f32 %v504, %v507
      %511 = vrot.lane.b32.xlu0 %v509, 64
      %v512 = vpop.permute.xlu0 %511
      %v514 = vmul.f32 %v492, %v512
      %516 = vrot.lane.b32.xlu0 %v514, 32
      %v517 = vpop.permute.xlu0 %516
      %v519 = vadd.f32 %v486, %v517
      %521 = vrot.lane.b32.xlu0 %v519, 32
      %v522 = vpop.permute.xlu0 %521
      %vm524 = vcmask 254976
      %525 = vst.msk [vmem:[%s324] sm:$0x3] %vm524, %v522
      %vm526 = vcmask 257026
      %527 = vst.msk [vmem:[%s330 - $0x2] sm:$0xc] %vm526, %v522
      %s528 = scalar_lea.vmem [#allocation2], 2
      %v529 = vld [vmem:[%s528] sm:$0x3]
      %s530 = sadd.s32 2, 8
      %s531 = scalar_lea.vmem [#allocation2], %s530
      %v532 = vld [vmem:[%s531] sm:$0x3]
      %v534 = vrot.slane %v532, 6
      %v536 = vsel %vm485, %v529, %v534
      %v537 = vxor.u32 %v536, 2147483648
      %v538 = vmul.f32 %v537, 1.442695
      %v539 = vpow.pop %v538
      %v540 = vadd.f32 %v539, 1.0
      %v541 = vrcp.pop %v540
      %v542 = vmul.f32 1.0, %v541
      %v543 = vsub.f32 %v503, %v536
      %545 = vrot.lane.b32.xlu0 %v543, 32
      %v546 = vpop.permute.xlu0 %545
      %v548 = vmul.f32 %v542, %v546
      %550 = vrot.lane.b32.xlu0 %v548, 96
      %v551 = vpop.permute.xlu0 %550
      %v553 = vadd.f32 %v536, %v551
      %v554 = vtanh.pop %v553
      %556 = vrot.lane.b32.xlu0 %v536, 32
      %v557 = vpop.permute.xlu0 %556
      %v559 = vsub.f32 %v554, %v557
      %561 = vrot.lane.b32.xlu0 %v559, 64
      %v562 = vpop.permute.xlu0 %561
      %v564 = vmul.f32 %v542, %v562
      %566 = vrot.lane.b32.xlu0 %v564, 32
      %v567 = vpop.permute.xlu0 %566
      %v569 = vadd.f32 %v536, %v567
      %571 = vrot.lane.b32.xlu0 %v569, 32
      %v572 = vpop.permute.xlu0 %571
      %s574 = scalar_lea.vmem %s324, 2
      %575 = vst.msk [vmem:[%s574] sm:$0x3] %vm524, %v572
      %s576 = scalar_lea.vmem %s330, 2
      %577 = vst.msk [vmem:[%s576 - $0x2] sm:$0xc] %vm526, %v572
      %s578 = scalar_lea.vmem [#allocation2], 4
      %v579 = vld [vmem:[%s578] sm:$0x3]
      %s580 = sadd.s32 4, 8
      %s581 = scalar_lea.vmem [#allocation2], %s580
      %v582 = vld [vmem:[%s581] sm:$0x3]
      %v584 = vrot.slane %v582, 6
      %v586 = vsel %vm485, %v579, %v584
      %v587 = vxor.u32 %v586, 2147483648
      %v588 = vmul.f32 %v587, 1.442695
      %v589 = vpow.pop %v588
      %v590 = vadd.f32 %v589, 1.0
      %v591 = vrcp.pop %v590
      %v592 = vmul.f32 1.0, %v591
      %v593 = vsub.f32 %v553, %v586
      %595 = vrot.lane.b32.xlu0 %v593, 32
      %v596 = vpop.permute.xlu0 %595
      %v598 = vmul.f32 %v592, %v596
      %600 = vrot.lane.b32.xlu0 %v598, 96
      %v601 = vpop.permute.xlu0 %600
      %v603 = vadd.f32 %v586, %v601
      %v604 = vtanh.pop %v603
      %606 = vrot.lane.b32.xlu0 %v586, 32
      %v607 = vpop.permute.xlu0 %606
      %v609 = vsub.f32 %v604, %v607
      %611 = vrot.lane.b32.xlu0 %v609, 64
      %v612 = vpop.permute.xlu0 %611
      %v614 = vmul.f32 %v592, %v612
      %616 = vrot.lane.b32.xlu0 %v614, 32
      %v617 = vpop.permute.xlu0 %616
      %v619 = vadd.f32 %v586, %v617
      %621 = vrot.lane.b32.xlu0 %v619, 32
      %v622 = vpop.permute.xlu0 %621
      %s624 = scalar_lea.vmem %s324, 4
      %625 = vst.msk [vmem:[%s624] sm:$0x3] %vm524, %v622
      %s626 = scalar_lea.vmem %s330, 4
      %627 = vst.msk [vmem:[%s626 - $0x2] sm:$0xc] %vm526, %v622
      %s628 = scalar_lea.vmem [#allocation2], 6
      %v629 = vld [vmem:[%s628] sm:$0x3]
      %s630 = sadd.s32 6, 8
      %s631 = scalar_lea.vmem [#allocation2], %s630
      %v632 = vld [vmem:[%s631] sm:$0x3]
      %v634 = vrot.slane %v632, 6
      %v636 = vsel %vm485, %v629, %v634
      %v637 = vxor.u32 %v636, 2147483648
      %v638 = vmul.f32 %v637, 1.442695
      %v639 = vpow.pop %v638
      %v640 = vadd.f32 %v639, 1.0
      %v641 = vrcp.pop %v640
      %v642 = vmul.f32 1.0, %v641
      %v643 = vsub.f32 %v603, %v636
      %645 = vrot.lane.b32.xlu0 %v643, 32
      %v646 = vpop.permute.xlu0 %645
      %v648 = vmul.f32 %v642, %v646
      %650 = vrot.lane.b32.xlu0 %v648, 96
      %v651 = vpop.permute.xlu0 %650
      %v653 = vadd.f32 %v636, %v651
      %v654 = vtanh.pop %v653
      %656 = vrot.lane.b32.xlu0 %v636, 32
      %v657 = vpop.permute.xlu0 %656
      %v659 = vsub.f32 %v654, %v657
      %661 = vrot.lane.b32.xlu0 %v659, 64
      %v662 = vpop.permute.xlu0 %661
      %v664 = vmul.f32 %v642, %v662
      %666 = vrot.lane.b32.xlu0 %v664, 32
      %v667 = vpop.permute.xlu0 %666
      %v669 = vadd.f32 %v636, %v667
      %671 = vrot.lane.b32.xlu0 %v669, 32
      %v672 = vpop.permute.xlu0 %671
      %s674 = scalar_lea.vmem %s324, 6
      %675 = vst.msk [vmem:[%s674] sm:$0x3] %vm524, %v672
      %s676 = scalar_lea.vmem %s330, 6
      %677 = vst.msk [vmem:[%s676 - $0x2] sm:$0xc] %vm526, %v672
      %vm678 = vcmask 257024
      %679 = vst.msk [vmem:[#allocation3] sm:$0xf] %vm678, %v653
      %680 = vst.msk [vmem:[%s8] sm:$0xf] %vm678, %v653
      %s681 = smul.u32 4, %s20
      %p682 = scmp.lt.s32.totalorder %s681, 7
      %s683 = scalar_select %p682, %s681, 7
      %s684 = smul.addr %s683, 2
      %s685 = scalar_lea.vmem %s6, %s684
      %s686 = smul.u32 4, %s20
      %p687 = scmp.lt.s32.totalorder %s686, 7
      %s688 = scalar_select %p687, %s686, 7
      %s689 = smul.addr %s688, 2
      %s690 = scalar_lea.vmem %s7, %s689
      // Predicated region
      $region49: #{encoder_forward.2} parent=43 // pred_check
        %p691 = pneg %p174
      $region50: #{encoder_forward.2} parent=43 // pred_check_branch
        %693 = sbr.rel (%p691) target = $region52
      $region51: #{encoder_forward.2} parent=43 // pred_region
        %s694 = smul.u32 4, %s20
      $region52: #{encoder_forward.2} parent=43 // pred_fallthru
        _
      // Predicated region
      $region53: #{encoder_forward.2} parent=43 // pred_check
        %p695 = pneg %p200
      $region54: #{encoder_forward.2} parent=43 // pred_check_branch
        %697 = sbr.rel (%p695) target = $region56
      $region55: #{encoder_forward.2} parent=43 // pred_region
        %s698 = smul.u32 4, %s20
      $region56: #{encoder_forward.2} parent=43 // pred_fallthru
        _
      // Predicated region
      $region57: #{encoder_forward.2} parent=43 // pred_check
        %p699 = pneg %p221
      $region58: #{encoder_forward.2} parent=43 // pred_check_branch
        %701 = sbr.rel (%p699) target = $region60
      $region59: #{encoder_forward.2} parent=43 // pred_region
        _
      $region60: #{encoder_forward.2} parent=43 // pred_fallthru
        _
      // Predicated region
      $region61: #{encoder_forward.2} parent=43 // pred_check
        %p702 = pneg %p221
      $region62: #{encoder_forward.2} parent=43 // pred_check_branch
        %704 = sbr.rel (%p702) target = $region64
      $region63: #{encoder_forward.2} parent=43 // pred_region
        _
      $region64: #{encoder_forward.2} parent=43 // pred_fallthru
        _
    $region44: #{encoder_forward.2} parent=5 // pred_fallthru
      _
    %p705 = scmp.le.s32.totalorder 2, %s15
    // Predicated region
    $region65: #{encoder_forward.2} parent=5 // pred_check
      %p706 = pneg %p705
    $region66: #{encoder_forward.2} parent=5 // pred_check_branch
      %708 = sbr.rel (%p706) target = $region68
    $region67: #{encoder_forward.2} parent=5 // pred_region
      %s709 = ssub.s32 %s15, 2
      // Predicated region
      $region69: #{encoder_forward.2} parent=67 // pred_check
        %p710 = pneg %p180
      $region70: #{encoder_forward.2} parent=67 // pred_check_branch
        %712 = sbr.rel (%p710) target = $region72
      $region71: #{encoder_forward.2} parent=67 // pred_region
        %s713 = smul.u32 4, %s21
        %p714 = scmp.lt.s32.totalorder %s713, 7
        %s715 = scalar_select %p714, %s713, 7
        %s716 = smul.addr %s715, 2
        %s717 = scalar_lea.vmem %s6, %s716
      $region72: #{encoder_forward.2} parent=67 // pred_fallthru
        _
      // Predicated region
      $region73: #{encoder_forward.2} parent=67 // pred_check
        %p718 = pneg %p206
      $region74: #{encoder_forward.2} parent=67 // pred_check_branch
        %720 = sbr.rel (%p718) target = $region76
      $region75: #{encoder_forward.2} parent=67 // pred_region
        %s721 = smul.u32 4, %s21
        %p722 = scmp.lt.s32.totalorder %s721, 7
        %s723 = scalar_select %p722, %s721, 7
        %s724 = smul.addr %s723, 2
        %s725 = scalar_lea.vmem %s7, %s724
      $region76: #{encoder_forward.2} parent=67 // pred_fallthru
        _
    $region68: #{encoder_forward.2} parent=5 // pred_fallthru
      _
  $region6: #{encoder_forward.2} parent=0 // loop_footer
    %s19 = sadd.s32 1, %s15
  $region7: #{encoder_forward.2} parent=0 // loop_footer_branch
    %14 = sbr.rel target = $region3
  $region8: #{encoder_forward.2} parent=0 // loop_exit
    _

// kernel: encoder_forward.3
$region0: #{encoder_forward.3}
  #allocation0 [shape = 'u32[]', space=smem, size = 0x4, offset = 0x4, fixed_abs, tag = 'smem constant byte address 0x4 - core index']
  #allocation1 [shape = 'u32[144,128]{1,0:T(1,128)}', space=vmem, size = 0x12000, scoped, tag = 'internal scratch']
  #allocation2 [shape = 'f32[2,8,128]{2,1,0:T(8,128)}', space=vmem, size = 0x2000, scoped, tag = 'scratch operand']
  #allocation3 [shape = 'f32[4,32]{1,0:T(4,128)}', space=vmem, size = 0x800, scoped, tag = 'scratch operand']
  %s0 = inlined_call_operand.vmem [shape: bf16[16,64], index: 0, kind: input, shape index: {}]
  %s1 = inlined_call_operand.vmem [shape: bf16[16,64], index: 1, kind: input, shape index: {}]
  %s2 = inlined_call_operand.vmem [shape: bf16[64,128], index: 2, kind: input, shape index: {}]
  %s3 = inlined_call_operand.vmem [shape: bf16[64,128], index: 3, kind: input, shape index: {}]
  %s4 = inlined_call_operand.vmem [shape: f32[1,128], index: 4, kind: input, shape index: {}]
  %s5 = inlined_call_operand.vmem [shape: f32[1,128], index: 5, kind: input, shape index: {}]
  %s6 = inlined_call_operand.vmem [shape: f32[8,2,32], index: 6, kind: output, shape index: {0}]
  %s7 = inlined_call_operand.vmem [shape: f32[8,2,32], index: 7, kind: output, shape index: {1}]
  %s8 = inlined_call_operand.vmem [shape: f32[4,32], index: 8, kind: output, shape index: {2}]
  %9 = xla_tuple %s6, %s7, %s8
  %s10 = sld [smem:[#allocation0]]
  $region77: #{encoder_forward.3} parent=0
    _
  %s12 = ssub.s32 1, %s10
  %s13 = scalar_select 0, %s12, %s10
  loop: start=0, step=1, limit=4
  $region2: #{encoder_forward.3} parent=0 // loop_pre_header
    _
  $region3: #{encoder_forward.3} parent=0 // loop_header
    %s15 = sphi 0, %s19
    %p16 = scmp.ge.s32.totalorder %s15, 4
    %s25 = sphi 0, %s27
    %s28 = sphi 0, %s25
    %s29 = sphi 0, %s28
    %s45 = sphi 0, %s29
    %s51 = sphi 0, %s53
    %s54 = sphi 0, %s51
    %s55 = sphi 0, %s54
    %s71 = sphi 0, %s55
    %s75 = sphi 0, %s75
    %s77 = sphi 0, %s75
    %s78 = sphi 0, %s77
    %s92 = sphi 0, %s78
    %s96 = sphi 0, %s96
    %s98 = sphi 0, %s96
    %s99 = sphi 0, %s98
    %s113 = sphi 0, %s99
    %s117 = sphi 0, %s117
    %s119 = sphi 0, %s117
    %s120 = sphi 0, %s119
    %s134 = sphi 0, %s120
    %s138 = sphi 0, %s138
    %s140 = sphi 0, %s138
    %s141 = sphi 0, %s140
    %s155 = sphi 0, %s141
    %s161 = sphi 0, %s163
    %s164 = sphi 0, %s161
    %s165 = sphi 0, %s164
    %s181 = sphi 0, %s165
    %s187 = sphi 0, %s189
    %s190 = sphi 0, %s187
    %s191 = sphi 0, %s190
    %s207 = sphi 0, %s191
    %s211 = sphi 0, %s211
    %s213 = sphi 0, %s211
    %s214 = sphi 0, %s213
    %s228 = sphi 0, %s214
  $region4: #{encoder_forward.3} parent=0 // loop_header_branch
    %18 = sbr.rel (%p16) target = $region8
  $region5: #{encoder_forward.3} parent=0 // loop_body
    %s20 = ssub.s32 %s15, 1
    %s21 = ssub.s32 %s15, 2
    %s22 = sadd.s32 %s15, 1
    %s23 = ssub.s32 %s15, %s22
    %p24 = scmp.eq.s32.totalorder %s23, 0
    %s26 = sadd.s32 %s25, 1
    %s27 = scalar_select %p24, %s25, %s26
    %p30 = pneg %p24
    %p31 = scmp.eq.s32.totalorder %s15, 1
    %p32 = por %p30, %p31
    %p33 = scmp.ne.s32.totalorder %s25, %s28
    %p34 = scmp.eq.s32.totalorder %s15, 0
    %p35 = por %p33, %p34
    %p36 = scmp.ne.s32.totalorder %s25, %s28
    %p37 = scmp.eq.s32.totalorder %s20, 1
    %p38 = por %p36, %p37
    %p39 = scmp.ne.s32.totalorder %s28, %s29
    %p40 = scmp.eq.s32.totalorder %s20, 0
    %p41 = por %p39, %p40
    %p42 = scmp.ne.s32.totalorder %s28, %s29
    %p43 = scmp.eq.s32.totalorder %s21, 1
    %p44 = por %p42, %p43
    %p46 = scmp.ne.s32.totalorder %s29, %s45
    %p47 = scmp.eq.s32.totalorder %s21, 0
    %p48 = por %p46, %p47
    %s49 = ssub.s32 %s15, %s22
    %p50 = scmp.eq.s32.totalorder %s49, 0
    %s52 = sadd.s32 %s51, 1
    %s53 = scalar_select %p50, %s51, %s52
    %p56 = pneg %p50
    %p57 = scmp.eq.s32.totalorder %s15, 1
    %p58 = por %p56, %p57
    %p59 = scmp.ne.s32.totalorder %s51, %s54
    %p60 = scmp.eq.s32.totalorder %s15, 0
    %p61 = por %p59, %p60
    %p62 = scmp.ne.s32.totalorder %s51, %s54
    %p63 = scmp.eq.s32.totalorder %s20, 1
    %p64 = por %p62, %p63
    %p65 = scmp.ne.s32.totalorder %s54, %s55
    %p66 = scmp.eq.s32.totalorder %s20, 0
    %p67 = por %p65, %p66
    %p68 = scmp.ne.s32.totalorder %s54, %s55
    %p69 = scmp.eq.s32.totalorder %s21, 1
    %p70 = por %p68, %p69
    %p72 = scmp.ne.s32.totalorder %s55, %s71
    %p73 = scmp.eq.s32.totalorder %s21, 0
    %p74 = por %p72, %p73
    %s76 = sadd.s32 %s75, 1
    %p79 = scmp.eq.s32.totalorder %s15, 1
    %p80 = scmp.ne.s32.totalorder %s75, %s77
    %p81 = scmp.eq.s32.totalorder %s15, 0
    %p82 = por %p80, %p81
    %p83 = scmp.ne.s32.totalorder %s75, %s77
    %p84 = scmp.eq.s32.totalorder %s20, 1
    %p85 = por %p83, %p84
    %p86 = scmp.ne.s32.totalorder %s77, %s78
    %p87 = scmp.eq.s32.totalorder %s20, 0
    %p88 = por %p86, %p87
    %p89 = scmp.ne.s32.totalorder %s77, %s78
    %p90 = scmp.eq.s32.totalorder %s21, 1
    %p91 = por %p89, %p90
    %p93 = scmp.ne.s32.totalorder %s78, %s92
    %p94 = scmp.eq.s32.totalorder %s21, 0
    %p95 = por %p93, %p94
    %s97 = sadd.s32 %s96, 1
    %p100 = scmp.eq.s32.totalorder %s15, 1
    %p101 = scmp.ne.s32.totalorder %s96, %s98
    %p102 = scmp.eq.s32.totalorder %s15, 0
    %p103 = por %p101, %p102
    %p104 = scmp.ne.s32.totalorder %s96, %s98
    %p105 = scmp.eq.s32.totalorder %s20, 1
    %p106 = por %p104, %p105
    %p107 = scmp.ne.s32.totalorder %s98, %s99
    %p108 = scmp.eq.s32.totalorder %s20, 0
    %p109 = por %p107, %p108
    %p110 = scmp.ne.s32.totalorder %s98, %s99
    %p111 = scmp.eq.s32.totalorder %s21, 1
    %p112 = por %p110, %p111
    %p114 = scmp.ne.s32.totalorder %s99, %s113
    %p115 = scmp.eq.s32.totalorder %s21, 0
    %p116 = por %p114, %p115
    %s118 = sadd.s32 %s117, 1
    %p121 = scmp.eq.s32.totalorder %s15, 1
    %p122 = scmp.ne.s32.totalorder %s117, %s119
    %p123 = scmp.eq.s32.totalorder %s15, 0
    %p124 = por %p122, %p123
    %p125 = scmp.ne.s32.totalorder %s117, %s119
    %p126 = scmp.eq.s32.totalorder %s20, 1
    %p127 = por %p125, %p126
    %p128 = scmp.ne.s32.totalorder %s119, %s120
    %p129 = scmp.eq.s32.totalorder %s20, 0
    %p130 = por %p128, %p129
    %p131 = scmp.ne.s32.totalorder %s119, %s120
    %p132 = scmp.eq.s32.totalorder %s21, 1
    %p133 = por %p131, %p132
    %p135 = scmp.ne.s32.totalorder %s120, %s134
    %p136 = scmp.eq.s32.totalorder %s21, 0
    %p137 = por %p135, %p136
    %s139 = sadd.s32 %s138, 1
    %p142 = scmp.eq.s32.totalorder %s15, 1
    %p143 = scmp.ne.s32.totalorder %s138, %s140
    %p144 = scmp.eq.s32.totalorder %s15, 0
    %p145 = por %p143, %p144
    %p146 = scmp.ne.s32.totalorder %s138, %s140
    %p147 = scmp.eq.s32.totalorder %s20, 1
    %p148 = por %p146, %p147
    %p149 = scmp.ne.s32.totalorder %s140, %s141
    %p150 = scmp.eq.s32.totalorder %s20, 0
    %p151 = por %p149, %p150
    %p152 = scmp.ne.s32.totalorder %s140, %s141
    %p153 = scmp.eq.s32.totalorder %s21, 1
    %p154 = por %p152, %p153
    %p156 = scmp.ne.s32.totalorder %s141, %s155
    %p157 = scmp.eq.s32.totalorder %s21, 0
    %p158 = por %p156, %p157
    %s159 = ssub.s32 %s15, %s22
    %p160 = scmp.eq.s32.totalorder %s159, 0
    %s162 = sadd.s32 %s161, 1
    %s163 = scalar_select %p160, %s161, %s162
    %p166 = pneg %p160
    %p167 = scmp.eq.s32.totalorder %s15, 1
    %p168 = por %p166, %p167
    %p169 = scmp.ne.s32.totalorder %s161, %s164
    %p170 = scmp.eq.s32.totalorder %s15, 0
    %p171 = por %p169, %p170
    %p172 = scmp.ne.s32.totalorder %s161, %s164
    %p173 = scmp.eq.s32.totalorder %s20, 1
    %p174 = por %p172, %p173
    %p175 = scmp.ne.s32.totalorder %s164, %s165
    %p176 = scmp.eq.s32.totalorder %s20, 0
    %p177 = por %p175, %p176
    %p178 = scmp.ne.s32.totalorder %s164, %s165
    %p179 = scmp.eq.s32.totalorder %s21, 1
    %p180 = por %p178, %p179
    %p182 = scmp.ne.s32.totalorder %s165, %s181
    %p183 = scmp.eq.s32.totalorder %s21, 0
    %p184 = por %p182, %p183
    %s185 = ssub.s32 %s15, %s22
    %p186 = scmp.eq.s32.totalorder %s185, 0
    %s188 = sadd.s32 %s187, 1
    %s189 = scalar_select %p186, %s187, %s188
    %p192 = pneg %p186
    %p193 = scmp.eq.s32.totalorder %s15, 1
    %p194 = por %p192, %p193
    %p195 = scmp.ne.s32.totalorder %s187, %s190
    %p196 = scmp.eq.s32.totalorder %s15, 0
    %p197 = por %p195, %p196
    %p198 = scmp.ne.s32.totalorder %s187, %s190
    %p199 = scmp.eq.s32.totalorder %s20, 1
    %p200 = por %p198, %p199
    %p201 = scmp.ne.s32.totalorder %s190, %s191
    %p202 = scmp.eq.s32.totalorder %s20, 0
    %p203 = por %p201, %p202
    %p204 = scmp.ne.s32.totalorder %s190, %s191
    %p205 = scmp.eq.s32.totalorder %s21, 1
    %p206 = por %p204, %p205
    %p208 = scmp.ne.s32.totalorder %s191, %s207
    %p209 = scmp.eq.s32.totalorder %s21, 0
    %p210 = por %p208, %p209
    %s212 = sadd.s32 %s211, 1
    %p215 = scmp.eq.s32.totalorder %s15, 1
    %p216 = scmp.ne.s32.totalorder %s211, %s213
    %p217 = scmp.eq.s32.totalorder %s15, 0
    %p218 = por %p216, %p217
    %p219 = scmp.ne.s32.totalorder %s211, %s213
    %p220 = scmp.eq.s32.totalorder %s20, 1
    %p221 = por %p219, %p220
    %p222 = scmp.ne.s32.totalorder %s213, %s214
    %p223 = scmp.eq.s32.totalorder %s20, 0
    %p224 = por %p222, %p223
    %p225 = scmp.ne.s32.totalorder %s213, %s214
    %p226 = scmp.eq.s32.totalorder %s21, 1
    %p227 = por %p225, %p226
    %p229 = scmp.ne.s32.totalorder %s214, %s228
    %p230 = scmp.eq.s32.totalorder %s21, 0
    %p231 = por %p229, %p230
    %p232 = scmp.le.s32.totalorder 1, %s15
    %p233 = scmp.lt.s32.totalorder %s15, 3
    %p234 = pnand %p232, %p233
    %p235 = pneg %p234
    // Predicated region
    $region9: #{encoder_forward.3} parent=5 // pred_check
      _
    $region10: #{encoder_forward.3} parent=5 // pred_check_branch
      %237 = sbr.rel (%p234) target = $region12
    $region11: #{encoder_forward.3} parent=5 // pred_region
      %s238 = ssub.s32 %s15, 1
      // Predicated region
      $region13: #{encoder_forward.3} parent=11 // pred_check
        %p239 = pneg %p88
      $region14: #{encoder_forward.3} parent=11 // pred_check_branch
        %241 = sbr.rel (%p239) target = $region16
      $region15: #{encoder_forward.3} parent=11 // pred_region
        _
      $region16: #{encoder_forward.3} parent=11 // pred_fallthru
        _
      // Predicated region
      $region17: #{encoder_forward.3} parent=11 // pred_check
        %p242 = pneg %p109
      $region18: #{encoder_forward.3} parent=11 // pred_check_branch
        %244 = sbr.rel (%p242) target = $region20
      $region19: #{encoder_forward.3} parent=11 // pred_region
        _
      $region20: #{encoder_forward.3} parent=11 // pred_fallthru
        _
      // Predicated region
      $region21: #{encoder_forward.3} parent=11 // pred_check
        %p245 = pneg %p130
      $region22: #{encoder_forward.3} parent=11 // pred_check_branch
        %247 = sbr.rel (%p245) target = $region24
      $region23: #{encoder_forward.3} parent=11 // pred_region
        _
      $region24: #{encoder_forward.3} parent=11 // pred_fallthru
        _
      // Predicated region
      $region25: #{encoder_forward.3} parent=11 // pred_check
        %p248 = pneg %p151
      $region26: #{encoder_forward.3} parent=11 // pred_check_branch
        %250 = sbr.rel (%p248) target = $region28
      $region27: #{encoder_forward.3} parent=11 // pred_region
        _
      $region28: #{encoder_forward.3} parent=11 // pred_fallthru
        _
    $region12: #{encoder_forward.3} parent=5 // pred_fallthru
      _
    %p251 = scmp.lt.s32.totalorder %s15, 2
    // Predicated region
    $region29: #{encoder_forward.3} parent=5 // pred_check
      %p252 = pneg %p251
    $region30: #{encoder_forward.3} parent=5 // pred_check_branch
      %254 = sbr.rel (%p252) target = $region32
    $region31: #{encoder_forward.3} parent=5 // pred_region
      // Predicated region
      $region33: #{encoder_forward.3} parent=31 // pred_check
        %p255 = pneg %p35
      $region34: #{encoder_forward.3} parent=31 // pred_check_branch
        %257 = sbr.rel (%p255) target = $region36
      $region35: #{encoder_forward.3} parent=31 // pred_region
        %p258 = scmp.lt.s32.totalorder %s15, 1
        %s259 = scalar_select %p258, %s15, 1
        %s260 = smul.addr %s259, 4
        %s261 = scalar_lea.vmem %s0, %s260
      $region36: #{encoder_forward.3} parent=31 // pred_fallthru
        _
      // Predicated region
      $region37: #{encoder_forward.3} parent=31 // pred_check
        %p262 = pneg %p61
      $region38: #{encoder_forward.3} parent=31 // pred_check_branch
        %264 = sbr.rel (%p262) target = $region40
      $region39: #{encoder_forward.3} parent=31 // pred_region
        %p265 = scmp.lt.s32.totalorder %s15, 1
        %s266 = scalar_select %p265, %s15, 1
        %s267 = smul.addr %s266, 4
        %s268 = scalar_lea.vmem %s1, %s267
      $region40: #{encoder_forward.3} parent=31 // pred_fallthru
        _
    $region32: #{encoder_forward.3} parent=5 // pred_fallthru
      _
    %p269 = scmp.le.s32.totalorder 1, %s15
    %p270 = scmp.lt.s32.totalorder %s15, 3
    %p271 = pnand %p269, %p270
    %p272 = pneg %p271
    // Predicated region
    $region41: #{encoder_forward.3} parent=5 // pred_check
      _
    $region42: #{encoder_forward.3} parent=5 // pred_check_branch
      %274 = sbr.rel (%p271) target = $region44
    $region43: #{encoder_forward.3} parent=5 // pred_region
      %s275 = ssub.s32 %s15, 1
      %p276 = scmp.lt.s32.totalorder %s20, 1
      %s277 = scalar_select %p276, %s20, 1
      %s278 = smul.addr %s277, 4
      %s279 = scalar_lea.vmem %s0, %s278
      %p280 = pneg %p41
      %p281 = pneg %p38
      %p282 = scmp.lt.s32.totalorder %s20, 1
      %s283 = scalar_select %p282, %s20, 1
      %s284 = smul.addr %s283, 4
      %s285 = scalar_lea.vmem %s1, %s284
      %p286 = pneg %p67
      %p287 = pneg %p64
      %p288 = pneg %p88
      %p289 = pneg %p85
      %p290 = pneg %p109
      %p291 = pneg %p106
      %p292 = pneg %p130
      %p293 = pneg %p127
      %p294 = pneg %p151
      %p295 = pneg %p148
      %p296 = pneg %p177
      %p297 = pneg %p174
      %s298 = smul.u32 4, %s20
      %p299 = scmp.lt.s32.totalorder %s298, 7
      %s300 = scalar_select %p299, %s298, 7
      %s301 = smul.addr %s300, 2
      %s302 = scalar_lea.vmem %s6, %s301
      %p303 = pneg %p203
      %p304 = pneg %p200
      %s305 = smul.u32 4, %s20
      %p306 = scmp.lt.s32.totalorder %s305, 7
      %s307 = scalar_select %p306, %s305, 7
      %s308 = smul.addr %s307, 2
      %s309 = scalar_lea.vmem %s7, %s308
      %p310 = pneg %p224
      %p311 = pneg %p221
      %p312 = scmp.lt.s32.totalorder %s20, 1
      %s313 = scalar_select %p312, %s20, 1
      %s314 = smul.addr %s313, 4
      %s315 = scalar_lea.vmem %s0, %s314
      %p316 = scmp.lt.s32.totalorder %s20, 1
      %s317 = scalar_select %p316, %s20, 1
      %s318 = smul.addr %s317, 4
      %s319 = scalar_lea.vmem %s1, %s318
      %s320 = smul.u32 4, %s20
      %p321 = scmp.lt.s32.totalorder %s320, 7
      %s322 = scalar_select %p321, %s320, 7
      %s323 = smul.addr %s322, 2
      %s324 = scalar_lea.vmem %s6, %s323
      %s325 = smul.u32 4, %s20
      %s326 = smul.u32 4, %s20
      %p327 = scmp.lt.s32.totalorder %s326, 7
      %s328 = scalar_select %p327, %s326, 7
      %s329 = smul.addr %s328, 2
      %s330 = scalar_lea.vmem %s7, %s329
      %s331 = smul.u32 4, %s20
      %p333 = scmp.eq.s32.totalorder %s20, 0
      // Predicated region
      $region45: #{encoder_forward.3} parent=43 // pred_check
        %p334 = pneg %p333
      $region46: #{encoder_forward.3} parent=43 // pred_check_branch
        %336 = sbr.rel (%p334) target = $region48
      $region47: #{encoder_forward.3} parent=43 // pred_region
        %vm337 = vcmask 257024
        %338 = vst.msk [vmem:[#allocation3] sm:$0xf] %vm337, 0.0
      $region48: #{encoder_forward.3} parent=43 // pred_fallthru
        _
      %v339 = vld [vmem:[%s315] sm:$0xf]
      %v340 = vld [vmem:[%s2] sm:$0xf]
      %v341 = vld [vmem:[%s2 + $0x4] sm:$0xf]
      %v342 = vld [vmem:[%s2 + $0x8] sm:$0xf]
      %v343 = vld [vmem:[%s2 + $0xc] sm:$0xf]
      %v344 = vld [vmem:[%s2 + $0x10] sm:$0xf]
      %v345 = vld [vmem:[%s2 + $0x14] sm:$0xf]
      %v346 = vld [vmem:[%s2 + $0x18] sm:$0xf]
      %v347 = vld [vmem:[%s2 + $0x1c] sm:$0xf]
      %v348 = vld [vmem:[%s4] sm:$0x1]
      %v350 = vlaneseq
      %v351 = vshrl.u32 %v350, 7
      %v352 = vsub.s32 0, %v351
      %v353 = vrot.slane %v348, %v352
      %v363 = vunpack.c.l.b16 %v340
      %v364 = vunpack.c.l.b16 %v341
      %v365 = vunpack.c.l.b16 %v342
      %v366 = vunpack.c.l.b16 %v343
      %v367 = vunpack.c.l.b16 %v344
      %v368 = vunpack.c.l.b16 %v345
      %v369 = vunpack.c.l.b16 %v346
      %v370 = vunpack.c.l.b16 %v347
      %v371 = vpack.c.b16 %v364, %v363
      %v372 = vpack.c.b16 %v366, %v365
      %v373 = vpack.c.b16 %v368, %v367
      %v374 = vpack.c.b16 %v370, %v369
      %vm379 = vcmask 523264
      %v381 = vsel %vm379, %v339, 0
      %383 = vmatprep.subr.bf16.mxu0 0
      %384 = vmatpush1.bf16.msra.mxu0 %v371
      %385 = vmatprep.subr.bf16.mxu0 0
      %386 = vmatpush1.bf16.msra.mxu0 %v372
      %387 = vmatprep.subr.bf16.mxu0 0
      %388 = vmatpush1.bf16.msra.mxu0 %v373
      %389 = vmatprep.subr.bf16.mxu0 0
      %390 = vmatpush1.bf16.msra.mxu0 %v374
      %391 = vmatprep.subr.bf16.mxu0 0
      %392 = vmatpush1.bf16.msra.mxu0 0
      %393 = vmatprep.subr.bf16.mxu0 0
      %394 = vmatpush1.bf16.msra.mxu0 0
      %395 = vmatprep.subr.bf16.mxu0 0
      %396 = vmatpush1.bf16.msra.mxu0 0
      %397 = vmatprep.subr.bf16.mxu0 0
      %398 = vmatpush1.bf16.msra.mxu0 0
      %399 = vmatprep.subr.bf16.mxu0 0
      %400 = vmatpush1.bf16.msra.mxu0 0
      %401 = vmatprep.subr.bf16.mxu0 0
      %402 = vmatpush1.bf16.msra.mxu0 0
      %403 = vmatprep.subr.bf16.mxu0 0
      %404 = vmatpush1.bf16.msra.mxu0 0
      %405 = vmatprep.subr.bf16.mxu0 0
      %406 = vmatpush1.bf16.msra.mxu0 0
      %407 = vmatprep.subr.bf16.mxu0 0
      %408 = vmatpush1.bf16.msra.mxu0 0
      %409 = vmatprep.subr.bf16.mxu0 0
      %410 = vmatpush1.bf16.msra.mxu0 0
      %411 = vmatprep.subr.bf16.mxu0 0
      %412 = vmatpush1.bf16.msra.mxu0 0
      %413 = vmatprep.subr.bf16.mxu0 0
      %414 = vmatpush1.bf16.msra.mxu0 0
      %415 = vmatprep.mubr.bf16.mxu0 0
      %416 = vmatmul.mubr.bf16.gmra.mrb[0].mxu0 %v381
      %v417 = vpop.f32.mrb[0].mxu0
      %v418 = vadd.f32 %v353, %v417
      %v419 = vpop.f32.mrb[0].mxu0
      %v420 = vpop.f32.mrb[0].mxu0
      %v421 = vpop.f32.mrb[0].mxu0
      %422 = vdwg.mxu0
      %423 = vst [vmem:[#allocation2] sm:$0xff] %v418
      %v424 = vld [vmem:[%s319] sm:$0xf]
      %v425 = vld [vmem:[%s3] sm:$0xf]
      %v426 = vld [vmem:[%s3 + $0x4] sm:$0xf]
      %v427 = vld [vmem:[%s3 + $0x8] sm:$0xf]
      %v428 = vld [vmem:[%s3 + $0xc] sm:$0xf]
      %v429 = vld [vmem:[%s3 + $0x10] sm:$0xf]
      %v430 = vld [vmem:[%s3 + $0x14] sm:$0xf]
      %v431 = vld [vmem:[%s3 + $0x18] sm:$0xf]
      %v432 = vld [vmem:[%s3 + $0x1c] sm:$0xf]
      %v433 = vld [vmem:[%s5] sm:$0x1]
      %v435 = vlaneseq
      %v436 = vshrl.u32 %v435, 7
      %v437 = vsub.s32 0, %v436
      %v438 = vrot.slane %v433, %v437
      %v448 = vunpack.c.l.b16 %v425
      %v449 = vunpack.c.l.b16 %v426
      %v450 = vunpack.c.l.b16 %v427
      %v451 = vunpack.c.l.b16 %v428
      %v452 = vunpack.c.l.b16 %v429
      %v453 = vunpack.c.l.b16 %v430
      %v454 = vunpack.c.l.b16 %v431
      %v455 = vunpack.c.l.b16 %v432
      %v456 = vpack.c.b16 %v449, %v448
      %v457 = vpack.c.b16 %v451, %v450
      %v458 = vpack.c.b16 %v453, %v452
      %v459 = vpack.c.b16 %v455, %v454
      %v465 = vsel %vm379, %v424, 0
      %467 = vmatprep.subr.bf16.mxu0 0
      %468 = vmatpush1.bf16.msra.mxu0 %v456
      %469 = vmatprep.subr.bf16.mxu0 0
      %470 = vmatpush1.bf16.msra.mxu0 %v457
      %471 = vmatprep.subr.bf16.mxu0 0
      %472 = vmatpush1.bf16.msra.mxu0 %v458
      %473 = vmatprep.subr.bf16.mxu0 0
      %474 = vmatpush1.bf16.msra.mxu0 %v459
      %475 = vmatprep.subr.bf16.mxu0 0
      %476 = vmatpush1.bf16.msra.mxu0 0
      %477 = vmatprep.subr.bf16.mxu0 0
      %478 = vmatpush1.bf16.msra.mxu0 0
      %479 = vmatprep.subr.bf16.mxu0 0
      %480 = vmatpush1.bf16.msra.mxu0 0
      %481 = vmatprep.subr.bf16.mxu0 0
      %482 = vmatpush1.bf16.msra.mxu0 0
      %483 = vmatprep.subr.bf16.mxu0 0
      %484 = vmatpush1.bf16.msra.mxu0 0
      %485 = vmatprep.subr.bf16.mxu0 0
      %486 = vmatpush1.bf16.msra.mxu0 0
      %487 = vmatprep.subr.bf16.mxu0 0
      %488 = vmatpush1.bf16.msra.mxu0 0
      %489 = vmatprep.subr.bf16.mxu0 0
      %490 = vmatpush1.bf16.msra.mxu0 0
      %491 = vmatprep.subr.bf16.mxu0 0
      %492 = vmatpush1.bf16.msra.mxu0 0
      %493 = vmatprep.subr.bf16.mxu0 0
      %494 = vmatpush1.bf16.msra.mxu0 0
      %495 = vmatprep.subr.bf16.mxu0 0
      %496 = vmatpush1.bf16.msra.mxu0 0
      %497 = vmatprep.subr.bf16.mxu0 0
      %498 = vmatpush1.bf16.msra.mxu0 0
      %499 = vmatprep.mubr.bf16.mxu0 0
      %500 = vmatmul.mubr.bf16.gmra.mrb[0].mxu0 %v465
      %v501 = vpop.f32.mrb[0].mxu0
      %v502 = vadd.f32 %v438, %v501
      %v503 = vpop.f32.mrb[0].mxu0
      %v504 = vpop.f32.mrb[0].mxu0
      %v505 = vpop.f32.mrb[0].mxu0
      %506 = vdwg.mxu0
      %s507 = scalar_lea.vmem [#allocation2], 8
      %508 = vst [vmem:[%s507] sm:$0xff] %v502
      %v509 = vld [vmem:[#allocation3] sm:$0xf]
      %v510 = vld [vmem:[#allocation2] sm:$0x3]
      %s511 = sadd.s32 0, 8
      %s512 = scalar_lea.vmem [#allocation2], %s511
      %v513 = vld [vmem:[%s512] sm:$0x3]
      %v515 = vrot.slane %v513, 6
      %vm517 = vcmask 1041408
      %v518 = vsel %vm517, %v510, %v515
      %v519 = vxor.u32 %v518, 2147483648
      %v520 = vmul.f32 %v519, 1.442695
      %v521 = vpow.pop %v520
      %v522 = vadd.f32 %v521, 1.0
      %v523 = vrcp.pop %v522
      %v524 = vmul.f32 1.0, %v523
      %v525 = vsub.f32 %v509, %v518
      %527 = vrot.lane.b32.xlu0 %v525, 32
      %v528 = vpop.permute.xlu0 %527
      %v530 = vmul.f32 %v524, %v528
      %532 = vrot.lane.b32.xlu0 %v530, 96
      %v533 = vpop.permute.xlu0 %532
      %v535 = vadd.f32 %v518, %v533
      %v536 = vtanh.pop %v535
      %538 = vrot.lane.b32.xlu0 %v518, 32
      %v539 = vpop.permute.xlu0 %538
      %v541 = vsub.f32 %v536, %v539
      %543 = vrot.lane.b32.xlu0 %v541, 64
      %v544 = vpop.permute.xlu0 %543
      %v546 = vmul.f32 %v524, %v544
      %548 = vrot.lane.b32.xlu0 %v546, 32
      %v549 = vpop.permute.xlu0 %548
      %v551 = vadd.f32 %v518, %v549
      %553 = vrot.lane.b32.xlu0 %v551, 32
      %v554 = vpop.permute.xlu0 %553
      %vm556 = vcmask 254976
      %557 = vst.msk [vmem:[%s324] sm:$0x3] %vm556, %v554
      %vm558 = vcmask 257026
      %559 = vst.msk [vmem:[%s330 - $0x2] sm:$0xc] %vm558, %v554
      %s560 = scalar_lea.vmem [#allocation2], 2
      %v561 = vld [vmem:[%s560] sm:$0x3]
      %s562 = sadd.s32 2, 8
      %s563 = scalar_lea.vmem [#allocation2], %s562
      %v564 = vld [vmem:[%s563] sm:$0x3]
      %v566 = vrot.slane %v564, 6
      %v568 = vsel %vm517, %v561, %v566
      %v569 = vxor.u32 %v568, 2147483648
      %v570 = vmul.f32 %v569, 1.442695
      %v571 = vpow.pop %v570
      %v572 = vadd.f32 %v571, 1.0
      %v573 = vrcp.pop %v572
      %v574 = vmul.f32 1.0, %v573
      %v575 = vsub.f32 %v535, %v568
      %577 = vrot.lane.b32.xlu0 %v575, 32
      %v578 = vpop.permute.xlu0 %577
      %v580 = vmul.f32 %v574, %v578
      %582 = vrot.lane.b32.xlu0 %v580, 96
      %v583 = vpop.permute.xlu0 %582
      %v585 = vadd.f32 %v568, %v583
      %v586 = vtanh.pop %v585
      %588 = vrot.lane.b32.xlu0 %v568, 32
      %v589 = vpop.permute.xlu0 %588
      %v591 = vsub.f32 %v586, %v589
      %593 = vrot.lane.b32.xlu0 %v591, 64
      %v594 = vpop.permute.xlu0 %593
      %v596 = vmul.f32 %v574, %v594
      %598 = vrot.lane.b32.xlu0 %v596, 32
      %v599 = vpop.permute.xlu0 %598
      %v601 = vadd.f32 %v568, %v599
      %603 = vrot.lane.b32.xlu0 %v601, 32
      %v604 = vpop.permute.xlu0 %603
      %s606 = scalar_lea.vmem %s324, 2
      %607 = vst.msk [vmem:[%s606] sm:$0x3] %vm556, %v604
      %s608 = scalar_lea.vmem %s330, 2
      %609 = vst.msk [vmem:[%s608 - $0x2] sm:$0xc] %vm558, %v604
      %s610 = scalar_lea.vmem [#allocation2], 4
      %v611 = vld [vmem:[%s610] sm:$0x3]
      %s612 = sadd.s32 4, 8
      %s613 = scalar_lea.vmem [#allocation2], %s612
      %v614 = vld [vmem:[%s613] sm:$0x3]
      %v616 = vrot.slane %v614, 6
      %v618 = vsel %vm517, %v611, %v616
      %v619 = vxor.u32 %v618, 2147483648
      %v620 = vmul.f32 %v619, 1.442695
      %v621 = vpow.pop %v620
      %v622 = vadd.f32 %v621, 1.0
      %v623 = vrcp.pop %v622
      %v624 = vmul.f32 1.0, %v623
      %v625 = vsub.f32 %v585, %v618
      %627 = vrot.lane.b32.xlu0 %v625, 32
      %v628 = vpop.permute.xlu0 %627
      %v630 = vmul.f32 %v624, %v628
      %632 = vrot.lane.b32.xlu0 %v630, 96
      %v633 = vpop.permute.xlu0 %632
      %v635 = vadd.f32 %v618, %v633
      %v636 = vtanh.pop %v635
      %638 = vrot.lane.b32.xlu0 %v618, 32
      %v639 = vpop.permute.xlu0 %638
      %v641 = vsub.f32 %v636, %v639
      %643 = vrot.lane.b32.xlu0 %v641, 64
      %v644 = vpop.permute.xlu0 %643
      %v646 = vmul.f32 %v624, %v644
      %648 = vrot.lane.b32.xlu0 %v646, 32
      %v649 = vpop.permute.xlu0 %648
      %v651 = vadd.f32 %v618, %v649
      %653 = vrot.lane.b32.xlu0 %v651, 32
      %v654 = vpop.permute.xlu0 %653
      %s656 = scalar_lea.vmem %s324, 4
      %657 = vst.msk [vmem:[%s656] sm:$0x3] %vm556, %v654
      %s658 = scalar_lea.vmem %s330, 4
      %659 = vst.msk [vmem:[%s658 - $0x2] sm:$0xc] %vm558, %v654
      %s660 = scalar_lea.vmem [#allocation2], 6
      %v661 = vld [vmem:[%s660] sm:$0x3]
      %s662 = sadd.s32 6, 8
      %s663 = scalar_lea.vmem [#allocation2], %s662
      %v664 = vld [vmem:[%s663] sm:$0x3]
      %v666 = vrot.slane %v664, 6
      %v668 = vsel %vm517, %v661, %v666
      %v669 = vxor.u32 %v668, 2147483648
      %v670 = vmul.f32 %v669, 1.442695
      %v671 = vpow.pop %v670
      %v672 = vadd.f32 %v671, 1.0
      %v673 = vrcp.pop %v672
      %v674 = vmul.f32 1.0, %v673
      %v675 = vsub.f32 %v635, %v668
      %677 = vrot.lane.b32.xlu0 %v675, 32
      %v678 = vpop.permute.xlu0 %677
      %v680 = vmul.f32 %v674, %v678
      %682 = vrot.lane.b32.xlu0 %v680, 96
      %v683 = vpop.permute.xlu0 %682
      %v685 = vadd.f32 %v668, %v683
      %v686 = vtanh.pop %v685
      %688 = vrot.lane.b32.xlu0 %v668, 32
      %v689 = vpop.permute.xlu0 %688
      %v691 = vsub.f32 %v686, %v689
      %693 = vrot.lane.b32.xlu0 %v691, 64
      %v694 = vpop.permute.xlu0 %693
      %v696 = vmul.f32 %v674, %v694
      %698 = vrot.lane.b32.xlu0 %v696, 32
      %v699 = vpop.permute.xlu0 %698
      %v701 = vadd.f32 %v668, %v699
      %703 = vrot.lane.b32.xlu0 %v701, 32
      %v704 = vpop.permute.xlu0 %703
      %s706 = scalar_lea.vmem %s324, 6
      %707 = vst.msk [vmem:[%s706] sm:$0x3] %vm556, %v704
      %s708 = scalar_lea.vmem %s330, 6
      %709 = vst.msk [vmem:[%s708 - $0x2] sm:$0xc] %vm558, %v704
      %vm710 = vcmask 257024
      %711 = vst.msk [vmem:[#allocation3] sm:$0xf] %vm710, %v685
      %712 = vst.msk [vmem:[%s8] sm:$0xf] %vm710, %v685
      %s713 = smul.u32 4, %s20
      %p714 = scmp.lt.s32.totalorder %s713, 7
      %s715 = scalar_select %p714, %s713, 7
      %s716 = smul.addr %s715, 2
      %s717 = scalar_lea.vmem %s6, %s716
      %s718 = smul.u32 4, %s20
      %p719 = scmp.lt.s32.totalorder %s718, 7
      %s720 = scalar_select %p719, %s718, 7
      %s721 = smul.addr %s720, 2
      %s722 = scalar_lea.vmem %s7, %s721
      // Predicated region
      $region49: #{encoder_forward.3} parent=43 // pred_check
        %p723 = pneg %p174
      $region50: #{encoder_forward.3} parent=43 // pred_check_branch
        %725 = sbr.rel (%p723) target = $region52
      $region51: #{encoder_forward.3} parent=43 // pred_region
        %s726 = smul.u32 4, %s20
      $region52: #{encoder_forward.3} parent=43 // pred_fallthru
        _
      // Predicated region
      $region53: #{encoder_forward.3} parent=43 // pred_check
        %p727 = pneg %p200
      $region54: #{encoder_forward.3} parent=43 // pred_check_branch
        %729 = sbr.rel (%p727) target = $region56
      $region55: #{encoder_forward.3} parent=43 // pred_region
        %s730 = smul.u32 4, %s20
      $region56: #{encoder_forward.3} parent=43 // pred_fallthru
        _
      // Predicated region
      $region57: #{encoder_forward.3} parent=43 // pred_check
        %p731 = pneg %p221
      $region58: #{encoder_forward.3} parent=43 // pred_check_branch
        %733 = sbr.rel (%p731) target = $region60
      $region59: #{encoder_forward.3} parent=43 // pred_region
        _
      $region60: #{encoder_forward.3} parent=43 // pred_fallthru
        _
      // Predicated region
      $region61: #{encoder_forward.3} parent=43 // pred_check
        %p734 = pneg %p221
      $region62: #{encoder_forward.3} parent=43 // pred_check_branch
        %736 = sbr.rel (%p734) target = $region64
      $region63: #{encoder_forward.3} parent=43 // pred_region
        _
      $region64: #{encoder_forward.3} parent=43 // pred_fallthru
        _
    $region44: #{encoder_forward.3} parent=5 // pred_fallthru
      _
    %p737 = scmp.le.s32.totalorder 2, %s15
    // Predicated region
    $region65: #{encoder_forward.3} parent=5 // pred_check
      %p738 = pneg %p737
    $region66: #{encoder_forward.3} parent=5 // pred_check_branch
      %740 = sbr.rel (%p738) target = $region68
    $region67: #{encoder_forward.3} parent=5 // pred_region
      %s741 = ssub.s32 %s15, 2
      // Predicated region
      $region69: #{encoder_forward.3} parent=67 // pred_check
        %p742 = pneg %p180
      $region70: #{encoder_forward.3} parent=67 // pred_check_branch
        %744 = sbr.rel (%p742) target = $region72
      $region71: #{encoder_forward.3} parent=67 // pred_region
        %s745 = smul.u32 4, %s21
        %p746 = scmp.lt.s32.totalorder %s745, 7
        %s747 = scalar_select %p746, %s745, 7
        %s748 = smul.addr %s747, 2
        %s749 = scalar_lea.vmem %s6, %s748
      $region72: #{encoder_forward.3} parent=67 // pred_fallthru
        _
      // Predicated region
      $region73: #{encoder_forward.3} parent=67 // pred_check
        %p750 = pneg %p206
      $region74: #{encoder_forward.3} parent=67 // pred_check_branch
        %752 = sbr.rel (%p750) target = $region76
      $region75: #{encoder_forward.3} parent=67 // pred_region
        %s753 = smul.u32 4, %s21
        %p754 = scmp.lt.s32.totalorder %s753, 7
        %s755 = scalar_select %p754, %s753, 7
        %s756 = smul.addr %s755, 2
        %s757 = scalar_lea.vmem %s7, %s756
      $region76: #{encoder_forward.3} parent=67 // pred_fallthru
        _
    $region68: #{encoder_forward.3} parent=5 // pred_fallthru
      _
  $region6: #{encoder_forward.3} parent=0 // loop_footer
    %s19 = sadd.s32 1, %s15
  $region7: #{encoder_forward.3} parent=0 // loop_footer_branch
    %14 = sbr.rel target = $region3
  $region8: #{encoder_forward.3} parent=0 // loop_exit
    _

</llo_original>
